<compile_context>
chip_gen: v7x
topology: tpu7x:2x2x1
jax: 0.10.0
libtpu: 0.0.40
codegen_flags: <defaults>
</compile_context>

<pallas_src>
import functools

import jax
import jax.numpy as jnp
from jax import lax
from jax.experimental import pallas as pl
from jax.experimental.pallas import tpu as pltpu


def _round_up(x, m):
    return (x + m - 1) // m * m


def _mha_kernel(x_ref, wt_ref, pt_ref, b_ref, o_ref, *, num_heads, hd_pad,
                compute_dtype):
    """One grid step = one batch row.

    x_ref  : (Tp, Cp)          activations (compute_dtype)
    wt_ref : (Cp, H*3*hd_pad)  fused QKV weight^T, q-columns pre-scaled by 1/sqrt(hd)
    pt_ref : (H*hd_pad, Cp)    output-projection weight^T, head-major rows
    b_ref  : (1, Cp)           output-projection bias (f32)
    o_ref  : (Tp, Cp)          f32 output block (lane-dense: Cp % 128 == 0)
    """
    x = x_ref[...]
    wt = wt_ref[...]
    bias = b_ref[...]

    Tp, Cp = x.shape

    # Single fused QKV projection on the MXU (f32 accumulation).
    qkv = jnp.dot(x, wt, preferred_element_type=jnp.float32)   # (Tp, H*3*hd_pad)

    # Causal mask built once, reused by every head (JAX does not CSE broadcasts).
    row = lax.broadcasted_iota(jnp.int32, (Tp, Tp), 0)
    col = lax.broadcasted_iota(jnp.int32, (Tp, Tp), 1)
    causal = col <= row
    neg = jnp.float32(-1e30)   # finite: NaN-safe; the diagonal is never masked.

    # Per-head attention with accumulated output projection (no lane-axis concat).
    acc = jnp.zeros((Tp, Cp), jnp.float32)
    for h in range(num_heads):          # static unroll
        base = h * 3 * hd_pad           # 128-aligned lane offsets -> free slicing
        q = qkv[:, base:base + hd_pad].astype(compute_dtype)
        k = qkv[:, base + hd_pad:base + 2 * hd_pad].astype(compute_dtype)
        v = qkv[:, base + 2 * hd_pad:base + 3 * hd_pad].astype(compute_dtype)

        # q @ k.T without materializing a transpose (scale already folded into wt).
        att = lax.dot_general(q, k, (((1,), (1,)), ((), ())),
                              preferred_element_type=jnp.float32)   # (Tp, Tp)
        att = jnp.where(causal, att, neg)

        # Numerically-stable softmax; exact divide (review correctness concern).
        att = att - jnp.max(att, axis=-1, keepdims=True)
        p = jnp.exp(att)
        p = p / jnp.sum(p, axis=-1, keepdims=True)

        o_h = jnp.dot(p.astype(compute_dtype), v,
                      preferred_element_type=jnp.float32)           # (Tp, hd_pad)
        acc = acc + jnp.dot(o_h.astype(compute_dtype),
                            pt_ref[h * hd_pad:(h + 1) * hd_pad, :],
                            preferred_element_type=jnp.float32)     # (Tp, Cp)

    o_ref[...] = acc + bias


def multi_head_attention(x, W, P, b, *, num_heads, compute_dtype=jnp.bfloat16):
    """Forward of the PyTorch MultiHeadAttention module.

    x: (N, T, C) f32.  W: (3C, C)  [nn.Linear(C, 3C, bias=False) weight],
    P: (C, C), b: (C,)  [nn.Linear(C, C) weight/bias].  Returns (N, T, C) f32.
    """
    N, T, C = x.shape
    assert C % num_heads == 0
    hd = C // num_heads
    scale = 1.0 / float(hd) ** 0.5

    # ---- Layout prep: lane-dense C, 128-aligned per-head q/k/v offsets --------
    Cp = _round_up(C, 128)
    hd_pad = _round_up(hd, 128)
    Tp = _round_up(T, 8)
    W3 = num_heads * 3 * hd_pad

    # Fused QKV weight: transpose to (C, 3C), regroup as (C, H, {q,k,v}, hd)
    # (matches view(n,t,H,3*hd) + split(h, hd)), fold 1/sqrt(hd) into q columns,
    # zero-pad so each head's q/k/v starts at a 128-aligned lane offset.
    Wt = jnp.asarray(W, jnp.float32).T.reshape(C, num_heads, 3, hd)
    qkv_scale = jnp.array([scale, 1.0, 1.0], jnp.float32).reshape(1, 1, 3, 1)
    Wt = Wt * qkv_scale
    Wt_pad = jnp.pad(Wt, ((0, Cp - C), (0, 0), (0, 0), (0, hd_pad - hd)))
    Wt_pad = Wt_pad.reshape(Cp, W3).astype(compute_dtype)

    # Output projection: transpose to (C, C), regroup rows per head, pad so head h
    # occupies rows [h*hd_pad, h*hd_pad + hd) -> per-head accumulation in-kernel.
    Pt = jnp.asarray(P, jnp.float32).T.reshape(num_heads, hd, C)
    Pt_pad = jnp.pad(Pt, ((0, 0), (0, hd_pad - hd), (0, Cp - C)))
    Pt_pad = Pt_pad.reshape(num_heads * hd_pad, Cp).astype(compute_dtype)

    b_pad = jnp.pad(jnp.asarray(b, jnp.float32), (0, Cp - C)).reshape(1, Cp)

    x_pad = jnp.pad(jnp.asarray(x, jnp.float32),
                    ((0, 0), (0, Tp - T), (0, Cp - C))).astype(compute_dtype)

    # ---- Cost estimate + explicit VMEM budget ---------------------------------
    itemsize = jnp.dtype(compute_dtype).itemsize
    flops = N * (2 * Tp * Cp * W3                        # fused QKV projection
                 + num_heads * 2 * Tp * Tp * hd_pad      # q @ k^T
                 + num_heads * 2 * Tp * Tp * hd_pad      # p @ v
                 + num_heads * 2 * Tp * hd_pad * Cp)     # out-proj accumulation
    transcendentals = N * num_heads * Tp * Tp
    bytes_accessed = (N * Tp * Cp * itemsize             # x
                      + Cp * W3 * itemsize               # Wqkv^T
                      + num_heads * hd_pad * Cp * itemsize   # P^T
                      + Cp * 4                           # bias
                      + N * Tp * Cp * 4)                 # output
    cost = pl.CostEstimate(flops=int(flops),
                           transcendentals=int(transcendentals),
                           bytes_accessed=int(bytes_accessed))

    # Double-buffered blocks + headroom for in-kernel qkv/score intermediates;
    # capped at 64 MiB so the same config stays legal on v7x.
    block_bytes = (Tp * Cp * itemsize + Cp * W3 * itemsize
                   + num_heads * hd_pad * Cp * itemsize + Cp * 4 + Tp * Cp * 4)
    vmem_limit = int(min(2 * block_bytes + (8 << 20), 64 << 20))

    kernel = functools.partial(_mha_kernel, num_heads=num_heads, hd_pad=hd_pad,
                               compute_dtype=compute_dtype)

    out_pad = pl.pallas_call(
        kernel,
        out_shape=jax.ShapeDtypeStruct((N, Tp, Cp), jnp.float32),
        grid_spec=pltpu.PrefetchScalarGridSpec(
            num_scalar_prefetch=0,
            grid=(N,),
            in_specs=[
                # x: one (squeezed) batch row per grid step, lane-dense.
                pl.BlockSpec((pl.Squeezed(), Tp, Cp), lambda n: (n, 0, 0)),
                # Weights / bias: constant index_map -> DMA'd once, VMEM-resident.
                pl.BlockSpec((Cp, W3), lambda n: (0, 0)),
                pl.BlockSpec((num_heads * hd_pad, Cp), lambda n: (0, 0)),
                pl.BlockSpec((1, Cp), lambda n: (0, 0)),
            ],
            out_specs=pl.BlockSpec((pl.Squeezed(), Tp, Cp), lambda n: (n, 0, 0)),
        ),
        compiler_params=pltpu.CompilerParams(
            # Batch rows are independent -> shard across TCs on v7x megacore.
            dimension_semantics=("parallel",),
            vmem_limit_bytes=vmem_limit,
        ),
        cost_estimate=cost,
    )(x_pad, Wt_pad, Pt_pad, b_pad)

    # Pure layout glue: drop the zero padding.
    return out_pad[:, :T, :C]


def mha_reference(x, W, P, b, *, num_heads):
    """Pure-JAX f32 reference mirroring the PyTorch forward."""
    n, t, c = x.shape
    hd = c // num_heads
    h = x @ W.T                                            # (n, t, 3c)
    h = h.reshape(n, t, num_heads, 3 * hd).transpose(0, 2, 1, 3)
    q, k, v = h[..., :hd], h[..., hd:2 * hd], h[..., 2 * hd:]
    att = (q @ jnp.swapaxes(k, -1, -2)) / jnp.sqrt(jnp.float32(hd))
    tril = jnp.tril(jnp.ones((t, t), jnp.float32))
    att = jnp.where(tril == 0, -jnp.inf, att)
    att = jax.nn.softmax(att, axis=-1)
    o = att @ v                                            # (n, H, t, hd)
    o = o.transpose(0, 2, 1, 3).reshape(n, t, c)
    return o @ P.T + b


if __name__ == "__main__":
    # batch=2, seq(context_len)=8, d_model=12, num_heads=4 => head_dim=3, which is
    # the only head_dim where torch.split(h, 3, dim=-1) literally yields (q, k, v).
    N, T, C, H = 2, 8, 12, 4

    key = jax.random.PRNGKey(0)
    kx, kw, kp, kb = jax.random.split(key, 4)
    x = jax.random.normal(kx, (N, T, C), dtype=jnp.float32)
    W = jax.random.normal(kw, (3 * C, C), dtype=jnp.float32) * (1.0 / (C ** 0.5))
    P = jax.random.normal(kp, (C, C), dtype=jnp.float32) * (1.0 / (C ** 0.5))
    b = jax.random.normal(kb, (C,), dtype=jnp.float32) * 0.1

    ref = mha_reference(x, W, P, b, num_heads=H)

    # 1) Exact-semantics check: f32 MXU operands must match the reference tightly
    #    (padding, head offsets, folded scale, per-head accumulation are exact).
    out_f32 = jax.block_until_ready(
        multi_head_attention(x, W, P, b, num_heads=H, compute_dtype=jnp.float32))
    assert out_f32.shape == (N, T, C)
    assert jnp.allclose(out_f32, ref, rtol=1e-5, atol=1e-5), (
        f"f32 max abs err = {jnp.max(jnp.abs(out_f32 - ref))}")

    # 2) Production config: bf16 MXU operands with f32 accumulation.  Tolerance
    #    covers bf16 input rounding (~2^-8 relative) through four chained matmuls
    #    and the softmax; expected max abs error is ~1e-2 at these magnitudes.
    out = jax.block_until_ready(multi_head_attention(x, W, P, b, num_heads=H))
    assert out.shape == (N, T, C)
    assert jnp.allclose(out, ref, rtol=5e-2, atol=5e-2), (
        f"bf16 max abs err = {jnp.max(jnp.abs(out - ref))}")

    print("KERNEL_OK")
</pallas_src>

<mosaic_0001>
module attributes {stable_mosaic.version = 11 : i64} {
  func.func @_mha_kernel(%arg0: i32, %arg1: memref<1x8x128xf32, #tpu.memory_space<vmem>>, %arg2: memref<128x1536xf32, #tpu.memory_space<vmem>>, %arg3: memref<512x128xf32, #tpu.memory_space<vmem>>, %arg4: memref<1x128xf32, #tpu.memory_space<vmem>>, %arg5: memref<1x8x128xf32, #tpu.memory_space<vmem>>) attributes {dimension_semantics = [#tpu.dimension_semantics<parallel>], iteration_bounds = array<i64: 2>, scalar_prefetch = 0 : i64, scratch_operands = 0 : i64, tpu.core_type = #tpu.core_type<tc>, window_params = [{transform_indices = @transform_0, window_bounds = array<i64: 1, 8, 128>}, {pipeline_mode = #tpu.pipeline_mode<synchronous>, transform_indices = @transform_1, window_bounds = array<i64: 128, 1536>}, {pipeline_mode = #tpu.pipeline_mode<synchronous>, transform_indices = @transform_2, window_bounds = array<i64: 512, 128>}, {pipeline_mode = #tpu.pipeline_mode<synchronous>, transform_indices = @transform_3, window_bounds = array<i64: 1, 128>}, {transform_indices = @transform_4, window_bounds = array<i64: 1, 8, 128>}]} {
    %c0 = arith.constant 0 : index
    %c0_0 = arith.constant 0 : index
    %c0_1 = arith.constant 0 : index
    %0 = vector.load %arg1[%c0, %c0_0, %c0_1] : memref<1x8x128xf32, #tpu.memory_space<vmem>>, vector<1x8x128xf32>
    %1 = vector.shape_cast %0 : vector<1x8x128xf32> to vector<8x128xf32>
    %c0_2 = arith.constant 0 : index
    %c0_3 = arith.constant 0 : index
    %2 = vector.load %arg2[%c0_2, %c0_3] : memref<128x1536xf32, #tpu.memory_space<vmem>>, vector<128x1536xf32>
    %c0_4 = arith.constant 0 : index
    %c0_5 = arith.constant 0 : index
    %3 = vector.load %arg4[%c0_4, %c0_5] : memref<1x128xf32, #tpu.memory_space<vmem>>, vector<1x128xf32>
    %cst = arith.constant dense<0.000000e+00> : vector<8x1536xf32>
    %4 = tpu.matmul %1, %2, %cst {dimension_numbers = #tpu.dot_dimension_numbers<[1], [0], [0], [1], [0, 0, 1, 1], [], []>} : vector<8x128xf32>, vector<128x1536xf32>, vector<8x1536xf32> -> vector<8x1536xf32>
    %5 = tpu.iota {dimensions = array<i32: 0>} : vector<8x8xi32>
    %6 = tpu.iota {dimensions = array<i32: 1>} : vector<8x8xi32>
    %7 = arith.cmpi sle, %6, %5 : vector<8x8xi32>
    %cst_6 = arith.constant 0.000000e+00 : f32
    %8 = vector.broadcast %cst_6 : f32 to vector<8x128xf32>
    %9 = vector.extract_strided_slice %4 {offsets = [0, 0], sizes = [8, 128], strides = [1, 1]} : vector<8x1536xf32> to vector<8x128xf32>
    %10 = vector.extract_strided_slice %4 {offsets = [0, 128], sizes = [8, 128], strides = [1, 1]} : vector<8x1536xf32> to vector<8x128xf32>
    %11 = vector.extract_strided_slice %4 {offsets = [0, 256], sizes = [8, 128], strides = [1, 1]} : vector<8x1536xf32> to vector<8x128xf32>
    %cst_7 = arith.constant dense<0.000000e+00> : vector<8x8xf32>
    %12 = tpu.matmul %9, %10, %cst_7 {dimension_numbers = #tpu.dot_dimension_numbers<[1], [1], [0], [0], [0, 0, 1, 0], [], []>} : vector<8x128xf32>, vector<8x128xf32>, vector<8x8xf32> -> vector<8x8xf32>
    %cst_8 = arith.constant -1.000000e+30 : f32
    %13 = vector.broadcast %cst_8 : f32 to vector<8x8xf32>
    %14 = arith.select %7, %12, %13 : vector<8x8xi1>, vector<8x8xf32>
    %cst_9 = arith.constant dense<0xFF800000> : vector<8xf32>
    %15 = vector.multi_reduction <maximumf>, %14, %cst_9 [1] : vector<8x8xf32> to vector<8xf32>
    %16 = vector.shape_cast %15 : vector<8xf32> to vector<8x1xf32>
    %17 = vector.broadcast %16 : vector<8x1xf32> to vector<8x8xf32>
    %18 = arith.subf %14, %17 : vector<8x8xf32>
    %19 = math.exp %18 : vector<8x8xf32>
    %cst_10 = arith.constant dense<0.000000e+00> : vector<8xf32>
    %20 = vector.multi_reduction <add>, %19, %cst_10 [1] : vector<8x8xf32> to vector<8xf32>
    %21 = vector.shape_cast %20 : vector<8xf32> to vector<8x1xf32>
    %22 = vector.broadcast %21 : vector<8x1xf32> to vector<8x8xf32>
    %23 = arith.divf %19, %22 : vector<8x8xf32>
    %cst_11 = arith.constant dense<0.000000e+00> : vector<8x128xf32>
    %24 = tpu.matmul %23, %11, %cst_11 {dimension_numbers = #tpu.dot_dimension_numbers<[1], [0], [0], [1], [0, 0, 1, 1], [], []>} : vector<8x8xf32>, vector<8x128xf32>, vector<8x128xf32> -> vector<8x128xf32>
    %c0_12 = arith.constant 0 : index
    %c0_13 = arith.constant 0 : index
    %25 = vector.load %arg3[%c0_12, %c0_13] : memref<512x128xf32, #tpu.memory_space<vmem>>, vector<128x128xf32>
    %cst_14 = arith.constant dense<0.000000e+00> : vector<8x128xf32>
    %26 = tpu.matmul %24, %25, %cst_14 {dimension_numbers = #tpu.dot_dimension_numbers<[1], [0], [0], [1], [0, 0, 1, 1], [], []>} : vector<8x128xf32>, vector<128x128xf32>, vector<8x128xf32> -> vector<8x128xf32>
    %27 = arith.addf %8, %26 : vector<8x128xf32>
    %28 = vector.extract_strided_slice %4 {offsets = [0, 384], sizes = [8, 128], strides = [1, 1]} : vector<8x1536xf32> to vector<8x128xf32>
    %29 = vector.extract_strided_slice %4 {offsets = [0, 512], sizes = [8, 128], strides = [1, 1]} : vector<8x1536xf32> to vector<8x128xf32>
    %30 = vector.extract_strided_slice %4 {offsets = [0, 640], sizes = [8, 128], strides = [1, 1]} : vector<8x1536xf32> to vector<8x128xf32>
    %cst_15 = arith.constant dense<0.000000e+00> : vector<8x8xf32>
    %31 = tpu.matmul %28, %29, %cst_15 {dimension_numbers = #tpu.dot_dimension_numbers<[1], [1], [0], [0], [0, 0, 1, 0], [], []>} : vector<8x128xf32>, vector<8x128xf32>, vector<8x8xf32> -> vector<8x8xf32>
    %cst_16 = arith.constant -1.000000e+30 : f32
    %32 = vector.broadcast %cst_16 : f32 to vector<8x8xf32>
    %33 = arith.select %7, %31, %32 : vector<8x8xi1>, vector<8x8xf32>
    %cst_17 = arith.constant dense<0xFF800000> : vector<8xf32>
    %34 = vector.multi_reduction <maximumf>, %33, %cst_17 [1] : vector<8x8xf32> to vector<8xf32>
    %35 = vector.shape_cast %34 : vector<8xf32> to vector<8x1xf32>
    %36 = vector.broadcast %35 : vector<8x1xf32> to vector<8x8xf32>
    %37 = arith.subf %33, %36 : vector<8x8xf32>
    %38 = math.exp %37 : vector<8x8xf32>
    %cst_18 = arith.constant dense<0.000000e+00> : vector<8xf32>
    %39 = vector.multi_reduction <add>, %38, %cst_18 [1] : vector<8x8xf32> to vector<8xf32>
    %40 = vector.shape_cast %39 : vector<8xf32> to vector<8x1xf32>
    %41 = vector.broadcast %40 : vector<8x1xf32> to vector<8x8xf32>
    %42 = arith.divf %38, %41 : vector<8x8xf32>
    %cst_19 = arith.constant dense<0.000000e+00> : vector<8x128xf32>
    %43 = tpu.matmul %42, %30, %cst_19 {dimension_numbers = #tpu.dot_dimension_numbers<[1], [0], [0], [1], [0, 0, 1, 1], [], []>} : vector<8x8xf32>, vector<8x128xf32>, vector<8x128xf32> -> vector<8x128xf32>
    %c128 = arith.constant 128 : index
    %c0_20 = arith.constant 0 : index
    %44 = vector.load %arg3[%c128, %c0_20] : memref<512x128xf32, #tpu.memory_space<vmem>>, vector<128x128xf32>
    %cst_21 = arith.constant dense<0.000000e+00> : vector<8x128xf32>
    %45 = tpu.matmul %43, %44, %cst_21 {dimension_numbers = #tpu.dot_dimension_numbers<[1], [0], [0], [1], [0, 0, 1, 1], [], []>} : vector<8x128xf32>, vector<128x128xf32>, vector<8x128xf32> -> vector<8x128xf32>
    %46 = arith.addf %27, %45 : vector<8x128xf32>
    %47 = vector.extract_strided_slice %4 {offsets = [0, 768], sizes = [8, 128], strides = [1, 1]} : vector<8x1536xf32> to vector<8x128xf32>
    %48 = vector.extract_strided_slice %4 {offsets = [0, 896], sizes = [8, 128], strides = [1, 1]} : vector<8x1536xf32> to vector<8x128xf32>
    %49 = vector.extract_strided_slice %4 {offsets = [0, 1024], sizes = [8, 128], strides = [1, 1]} : vector<8x1536xf32> to vector<8x128xf32>
    %cst_22 = arith.constant dense<0.000000e+00> : vector<8x8xf32>
    %50 = tpu.matmul %47, %48, %cst_22 {dimension_numbers = #tpu.dot_dimension_numbers<[1], [1], [0], [0], [0, 0, 1, 0], [], []>} : vector<8x128xf32>, vector<8x128xf32>, vector<8x8xf32> -> vector<8x8xf32>
    %cst_23 = arith.constant -1.000000e+30 : f32
    %51 = vector.broadcast %cst_23 : f32 to vector<8x8xf32>
    %52 = arith.select %7, %50, %51 : vector<8x8xi1>, vector<8x8xf32>
    %cst_24 = arith.constant dense<0xFF800000> : vector<8xf32>
    %53 = vector.multi_reduction <maximumf>, %52, %cst_24 [1] : vector<8x8xf32> to vector<8xf32>
    %54 = vector.shape_cast %53 : vector<8xf32> to vector<8x1xf32>
    %55 = vector.broadcast %54 : vector<8x1xf32> to vector<8x8xf32>
    %56 = arith.subf %52, %55 : vector<8x8xf32>
    %57 = math.exp %56 : vector<8x8xf32>
    %cst_25 = arith.constant dense<0.000000e+00> : vector<8xf32>
    %58 = vector.multi_reduction <add>, %57, %cst_25 [1] : vector<8x8xf32> to vector<8xf32>
    %59 = vector.shape_cast %58 : vector<8xf32> to vector<8x1xf32>
    %60 = vector.broadcast %59 : vector<8x1xf32> to vector<8x8xf32>
    %61 = arith.divf %57, %60 : vector<8x8xf32>
    %cst_26 = arith.constant dense<0.000000e+00> : vector<8x128xf32>
    %62 = tpu.matmul %61, %49, %cst_26 {dimension_numbers = #tpu.dot_dimension_numbers<[1], [0], [0], [1], [0, 0, 1, 1], [], []>} : vector<8x8xf32>, vector<8x128xf32>, vector<8x128xf32> -> vector<8x128xf32>
    %c256 = arith.constant 256 : index
    %c0_27 = arith.constant 0 : index
    %63 = vector.load %arg3[%c256, %c0_27] : memref<512x128xf32, #tpu.memory_space<vmem>>, vector<128x128xf32>
    %cst_28 = arith.constant dense<0.000000e+00> : vector<8x128xf32>
    %64 = tpu.matmul %62, %63, %cst_28 {dimension_numbers = #tpu.dot_dimension_numbers<[1], [0], [0], [1], [0, 0, 1, 1], [], []>} : vector<8x128xf32>, vector<128x128xf32>, vector<8x128xf32> -> vector<8x128xf32>
    %65 = arith.addf %46, %64 : vector<8x128xf32>
    %66 = vector.extract_strided_slice %4 {offsets = [0, 1152], sizes = [8, 128], strides = [1, 1]} : vector<8x1536xf32> to vector<8x128xf32>
    %67 = vector.extract_strided_slice %4 {offsets = [0, 1280], sizes = [8, 128], strides = [1, 1]} : vector<8x1536xf32> to vector<8x128xf32>
    %68 = vector.extract_strided_slice %4 {offsets = [0, 1408], sizes = [8, 128], strides = [1, 1]} : vector<8x1536xf32> to vector<8x128xf32>
    %cst_29 = arith.constant dense<0.000000e+00> : vector<8x8xf32>
    %69 = tpu.matmul %66, %67, %cst_29 {dimension_numbers = #tpu.dot_dimension_numbers<[1], [1], [0], [0], [0, 0, 1, 0], [], []>} : vector<8x128xf32>, vector<8x128xf32>, vector<8x8xf32> -> vector<8x8xf32>
    %cst_30 = arith.constant -1.000000e+30 : f32
    %70 = vector.broadcast %cst_30 : f32 to vector<8x8xf32>
    %71 = arith.select %7, %69, %70 : vector<8x8xi1>, vector<8x8xf32>
    %cst_31 = arith.constant dense<0xFF800000> : vector<8xf32>
    %72 = vector.multi_reduction <maximumf>, %71, %cst_31 [1] : vector<8x8xf32> to vector<8xf32>
    %73 = vector.shape_cast %72 : vector<8xf32> to vector<8x1xf32>
    %74 = vector.broadcast %73 : vector<8x1xf32> to vector<8x8xf32>
    %75 = arith.subf %71, %74 : vector<8x8xf32>
    %76 = math.exp %75 : vector<8x8xf32>
    %cst_32 = arith.constant dense<0.000000e+00> : vector<8xf32>
    %77 = vector.multi_reduction <add>, %76, %cst_32 [1] : vector<8x8xf32> to vector<8xf32>
    %78 = vector.shape_cast %77 : vector<8xf32> to vector<8x1xf32>
    %79 = vector.broadcast %78 : vector<8x1xf32> to vector<8x8xf32>
    %80 = arith.divf %76, %79 : vector<8x8xf32>
    %cst_33 = arith.constant dense<0.000000e+00> : vector<8x128xf32>
    %81 = tpu.matmul %80, %68, %cst_33 {dimension_numbers = #tpu.dot_dimension_numbers<[1], [0], [0], [1], [0, 0, 1, 1], [], []>} : vector<8x8xf32>, vector<8x128xf32>, vector<8x128xf32> -> vector<8x128xf32>
    %c384 = arith.constant 384 : index
    %c0_34 = arith.constant 0 : index
    %82 = vector.load %arg3[%c384, %c0_34] : memref<512x128xf32, #tpu.memory_space<vmem>>, vector<128x128xf32>
    %cst_35 = arith.constant dense<0.000000e+00> : vector<8x128xf32>
    %83 = tpu.matmul %81, %82, %cst_35 {dimension_numbers = #tpu.dot_dimension_numbers<[1], [0], [0], [1], [0, 0, 1, 1], [], []>} : vector<8x128xf32>, vector<128x128xf32>, vector<8x128xf32> -> vector<8x128xf32>
    %84 = arith.addf %65, %83 : vector<8x128xf32>
    %85 = vector.broadcast %3 : vector<1x128xf32> to vector<8x128xf32>
    %86 = arith.addf %84, %85 : vector<8x128xf32>
    %c0_36 = arith.constant 0 : index
    %c0_37 = arith.constant 0 : index
    %c0_38 = arith.constant 0 : index
    %87 = vector.load %arg5[%c0_36, %c0_37, %c0_38] : memref<1x8x128xf32, #tpu.memory_space<vmem>>, vector<1x8x128xf32>
    %88 = vector.shape_cast %87 : vector<1x8x128xf32> to vector<8x128xf32>
    %89 = vector.shape_cast %86 : vector<8x128xf32> to vector<1x8x128xf32>
    tpu.vector_store %arg5[%c0_36, %c0_37, %c0_38], %89 {strides = array<i32>} : memref<1x8x128xf32, #tpu.memory_space<vmem>>, vector<1x8x128xf32>,
    return
  }
  func.func @transform_0(%arg0: i32) -> (i32, i32, i32) {
    %c0_i32 = arith.constant 0 : i32
    %c0_i32_0 = arith.constant 0 : i32
    %c0_i32_1 = arith.constant 0 : i32
    return %arg0, %c0_i32, %c0_i32_0 : i32, i32, i32
  }
  func.func @transform_1(%arg0: i32) -> (i32, i32) {
    %c0_i32 = arith.constant 0 : i32
    %c0_i32_0 = arith.constant 0 : i32
    %c0_i32_1 = arith.constant 0 : i32
    return %c0_i32, %c0_i32_0 : i32, i32
  }
  func.func @transform_2(%arg0: i32) -> (i32, i32) {
    %c0_i32 = arith.constant 0 : i32
    %c0_i32_0 = arith.constant 0 : i32
    %c0_i32_1 = arith.constant 0 : i32
    return %c0_i32, %c0_i32_0 : i32, i32
  }
  func.func @transform_3(%arg0: i32) -> (i32, i32) {
    %c0_i32 = arith.constant 0 : i32
    %c0_i32_0 = arith.constant 0 : i32
    %c0_i32_1 = arith.constant 0 : i32
    return %c0_i32, %c0_i32_0 : i32, i32
  }
  func.func @transform_4(%arg0: i32) -> (i32, i32, i32) {
    %c0_i32 = arith.constant 0 : i32
    %c0_i32_0 = arith.constant 0 : i32
    %c0_i32_1 = arith.constant 0 : i32
    return %arg0, %c0_i32, %c0_i32_0 : i32, i32, i32
  }
}

</mosaic_0001>

<llo_original>
// kernel: tpu_custom_call.1
$region0: #{tpu_custom_call.1}
  #allocation0 [shape = 'u32[]', space=smem, size = 0x4, offset = 0x4, fixed_abs, tag = 'smem constant byte address 0x4 - core index']
  #allocation1 [shape = 'u32[144,128]{1,0:T(1,128)}', space=vmem, size = 0x12000, scoped, tag = 'internal scratch']
  %s0 = inlined_call_operand.hbm [shape: f32[2,8,128], index: 0, kind: input, shape index: {}]
  %s1 = inlined_call_operand.hbm [shape: f32[128,1536], index: 1, kind: input, shape index: {}]
  %s2 = inlined_call_operand.hbm [shape: f32[512,128], index: 2, kind: input, shape index: {}]
  %s3 = inlined_call_operand.vmem [shape: f32[1,128], index: 3, kind: input, shape index: {}]
  %s4 = inlined_call_operand.hbm [shape: f32[2,8,128], index: 4, kind: output, shape index: {}]
  %s5 = sld [smem:[#allocation0]]
  $region61: #{tpu_custom_call.1} parent=0
    _
  %s7 = ssub.s32 1, %s5
  %s8 = scalar_select 0, %s7, %s5
  $region1: #{tpu_custom_call.1} parent=0
    #allocation2 [shape = 'u8[8192]{0}', space=vmem, size = 0x2000, scoped, tag = 'input window, operand 0']
    #allocation3 [shape = 's32[2]{0}', space=sflag, size = 0x8, scoped, tag = 'scoped memory for tpu_custom_call.1']
    #allocation4 [shape = 's32[2]{0}', space=sflag, size = 0x8, scoped, tag = 'scoped memory for tpu_custom_call.1']
    #allocation5 [shape = 'u8[786432]{0}', space=vmem, size = 0xc0000, scoped, tag = 'input window, operand 1, single buffered']
    #allocation6 [shape = 's32[1]{0}', space=sflag, size = 0x4, scoped, tag = 'scoped memory for tpu_custom_call.1']
    #allocation7 [shape = 'u8[262144]{0}', space=vmem, size = 0x40000, scoped, tag = 'input window, operand 2, single buffered']
    #allocation8 [shape = 'u8[8192]{0}', space=vmem, size = 0x2000, scoped, tag = 'output window, operand 0']
    %9 = vsyncpa [#allocation3], 0
    %s10 = scalar_lea.sflag [#allocation3], 1
    %11 = vsyncpa %s10, 0
    %12 = vsyncpa [#allocation6], 0
    %13 = vsyncpa [#allocation4], 0
    %s14 = scalar_lea.sflag [#allocation4], 1
    %15 = vsyncpa %s14, 0
    loop: start=0, step=1, limit=4
    $region2: #{tpu_custom_call.1} parent=1 // loop_pre_header
      _
    $region3: #{tpu_custom_call.1} parent=1 // loop_header
      %s17 = sphi 0, %s21
      %p18 = scmp.ge.s32.totalorder %s17, 4
      %s27 = sphi 0, %s29
      %s30 = sphi 0, %s27
      %s31 = sphi 0, %s30
      %s47 = sphi 0, %s31
      %s51 = sphi 0, %s51
      %s53 = sphi 0, %s51
      %s54 = sphi 0, %s53
      %s68 = sphi 0, %s54
      %s72 = sphi 0, %s72
      %s74 = sphi 0, %s72
      %s75 = sphi 0, %s74
      %s89 = sphi 0, %s75
      %s93 = sphi 0, %s93
      %s95 = sphi 0, %s93
      %s96 = sphi 0, %s95
      %s110 = sphi 0, %s96
      %s116 = sphi 0, %s118
      %s119 = sphi 0, %s116
      %s120 = sphi 0, %s119
      %s136 = sphi 0, %s120
    $region4: #{tpu_custom_call.1} parent=1 // loop_header_branch
      %20 = sbr.rel (%p18) target = $region8
    $region5: #{tpu_custom_call.1} parent=1 // loop_body
      %s22 = ssub.s32 %s17, 1
      %s23 = ssub.s32 %s17, 2
      %s24 = sadd.s32 %s17, 1
      %s25 = ssub.s32 %s17, %s24
      %p26 = scmp.eq.s32.totalorder %s25, 0
      %s28 = sadd.s32 %s27, 1
      %s29 = scalar_select %p26, %s27, %s28
      %p32 = pneg %p26
      %p33 = scmp.eq.s32.totalorder %s17, 1
      %p34 = por %p32, %p33
      %p35 = scmp.ne.s32.totalorder %s27, %s30
      %p36 = scmp.eq.s32.totalorder %s17, 0
      %p37 = por %p35, %p36
      %p38 = scmp.ne.s32.totalorder %s27, %s30
      %p39 = scmp.eq.s32.totalorder %s22, 1
      %p40 = por %p38, %p39
      %p41 = scmp.ne.s32.totalorder %s30, %s31
      %p42 = scmp.eq.s32.totalorder %s22, 0
      %p43 = por %p41, %p42
      %p44 = scmp.ne.s32.totalorder %s30, %s31
      %p45 = scmp.eq.s32.totalorder %s23, 1
      %p46 = por %p44, %p45
      %p48 = scmp.ne.s32.totalorder %s31, %s47
      %p49 = scmp.eq.s32.totalorder %s23, 0
      %p50 = por %p48, %p49
      %s52 = sadd.s32 %s51, 1
      %p55 = scmp.eq.s32.totalorder %s17, 1
      %p56 = scmp.ne.s32.totalorder %s51, %s53
      %p57 = scmp.eq.s32.totalorder %s17, 0
      %p58 = por %p56, %p57
      %p59 = scmp.ne.s32.totalorder %s51, %s53
      %p60 = scmp.eq.s32.totalorder %s22, 1
      %p61 = por %p59, %p60
      %p62 = scmp.ne.s32.totalorder %s53, %s54
      %p63 = scmp.eq.s32.totalorder %s22, 0
      %p64 = por %p62, %p63
      %p65 = scmp.ne.s32.totalorder %s53, %s54
      %p66 = scmp.eq.s32.totalorder %s23, 1
      %p67 = por %p65, %p66
      %p69 = scmp.ne.s32.totalorder %s54, %s68
      %p70 = scmp.eq.s32.totalorder %s23, 0
      %p71 = por %p69, %p70
      %s73 = sadd.s32 %s72, 1
      %p76 = scmp.eq.s32.totalorder %s17, 1
      %p77 = scmp.ne.s32.totalorder %s72, %s74
      %p78 = scmp.eq.s32.totalorder %s17, 0
      %p79 = por %p77, %p78
      %p80 = scmp.ne.s32.totalorder %s72, %s74
      %p81 = scmp.eq.s32.totalorder %s22, 1
      %p82 = por %p80, %p81
      %p83 = scmp.ne.s32.totalorder %s74, %s75
      %p84 = scmp.eq.s32.totalorder %s22, 0
      %p85 = por %p83, %p84
      %p86 = scmp.ne.s32.totalorder %s74, %s75
      %p87 = scmp.eq.s32.totalorder %s23, 1
      %p88 = por %p86, %p87
      %p90 = scmp.ne.s32.totalorder %s75, %s89
      %p91 = scmp.eq.s32.totalorder %s23, 0
      %p92 = por %p90, %p91
      %s94 = sadd.s32 %s93, 1
      %p97 = scmp.eq.s32.totalorder %s17, 1
      %p98 = scmp.ne.s32.totalorder %s93, %s95
      %p99 = scmp.eq.s32.totalorder %s17, 0
      %p100 = por %p98, %p99
      %p101 = scmp.ne.s32.totalorder %s93, %s95
      %p102 = scmp.eq.s32.totalorder %s22, 1
      %p103 = por %p101, %p102
      %p104 = scmp.ne.s32.totalorder %s95, %s96
      %p105 = scmp.eq.s32.totalorder %s22, 0
      %p106 = por %p104, %p105
      %p107 = scmp.ne.s32.totalorder %s95, %s96
      %p108 = scmp.eq.s32.totalorder %s23, 1
      %p109 = por %p107, %p108
      %p111 = scmp.ne.s32.totalorder %s96, %s110
      %p112 = scmp.eq.s32.totalorder %s23, 0
      %p113 = por %p111, %p112
      %s114 = ssub.s32 %s17, %s24
      %p115 = scmp.eq.s32.totalorder %s114, 0
      %s117 = sadd.s32 %s116, 1
      %s118 = scalar_select %p115, %s116, %s117
      %p121 = pneg %p115
      %p122 = scmp.eq.s32.totalorder %s17, 1
      %p123 = por %p121, %p122
      %p124 = scmp.ne.s32.totalorder %s116, %s119
      %p125 = scmp.eq.s32.totalorder %s17, 0
      %p126 = por %p124, %p125
      %p127 = scmp.ne.s32.totalorder %s116, %s119
      %p128 = scmp.eq.s32.totalorder %s22, 1
      %p129 = por %p127, %p128
      %p130 = scmp.ne.s32.totalorder %s119, %s120
      %p131 = scmp.eq.s32.totalorder %s22, 0
      %p132 = por %p130, %p131
      %p133 = scmp.ne.s32.totalorder %s119, %s120
      %p134 = scmp.eq.s32.totalorder %s23, 1
      %p135 = por %p133, %p134
      %p137 = scmp.ne.s32.totalorder %s120, %s136
      %p138 = scmp.eq.s32.totalorder %s23, 0
      %p139 = por %p137, %p138
      %p140 = scmp.le.s32.totalorder 1, %s17
      %p141 = scmp.lt.s32.totalorder %s17, 3
      %p142 = pnand %p140, %p141
      %p143 = pneg %p142
      // Predicated region
      $region9: #{tpu_custom_call.1} parent=5 // pred_check
        _
      $region10: #{tpu_custom_call.1} parent=5 // pred_check_branch
        %145 = sbr.rel (%p142) target = $region12
      $region11: #{tpu_custom_call.1} parent=5 // pred_region
        %s146 = ssub.s32 %s17, 1
        // Predicated region
        $region13: #{tpu_custom_call.1} parent=11 // pred_check
          %p147 = pneg %p64
        $region14: #{tpu_custom_call.1} parent=11 // pred_check_branch
          %149 = sbr.rel (%p147) target = $region16
        $region15: #{tpu_custom_call.1} parent=11 // pred_region
          %s151 = ssub.s32 24576, 24576
          %152 = vsyncadd [#allocation6], %s151
          %s153 = sshll.u32 [#allocation5], 4
          %s154 = int_to_ptr.vmem [resolvable:$true] %s153
          %159 = dma.hbm_to_vmem [thread:$0]  %s1, 24576, %s154, [#allocation6], 1536, 1536, 96
        $region16: #{tpu_custom_call.1} parent=11 // pred_fallthru
          _
        // Predicated region
        $region17: #{tpu_custom_call.1} parent=11 // pred_check
          %p160 = pneg %p85
        $region18: #{tpu_custom_call.1} parent=11 // pred_check_branch
          %162 = sbr.rel (%p160) target = $region20
        $region19: #{tpu_custom_call.1} parent=11 // pred_region
          %s164 = ssub.s32 8192, 8192
          %165 = vsyncadd [#allocation6], %s164
          %s166 = sshll.u32 [#allocation7], 4
          %s167 = int_to_ptr.vmem [resolvable:$true] %s166
          %172 = dma.hbm_to_vmem [thread:$0]  %s2, 8192, %s167, [#allocation6], 128, 128, 8
        $region20: #{tpu_custom_call.1} parent=11 // pred_fallthru
          _
        // Predicated region
        $region21: #{tpu_custom_call.1} parent=11 // pred_check
          %p173 = pneg %p106
        $region22: #{tpu_custom_call.1} parent=11 // pred_check_branch
          %175 = sbr.rel (%p173) target = $region24
        $region23: #{tpu_custom_call.1} parent=11 // pred_region
          _
        $region24: #{tpu_custom_call.1} parent=11 // pred_fallthru
          _
      $region12: #{tpu_custom_call.1} parent=5 // pred_fallthru
        _
      %p176 = scmp.lt.s32.totalorder %s17, 2
      // Predicated region
      $region25: #{tpu_custom_call.1} parent=5 // pred_check
        %p177 = pneg %p176
      $region26: #{tpu_custom_call.1} parent=5 // pred_check_branch
        %179 = sbr.rel (%p177) target = $region28
      $region27: #{tpu_custom_call.1} parent=5 // pred_region
        // Predicated region
        $region29: #{tpu_custom_call.1} parent=27 // pred_check
          %p180 = pneg %p37
        $region30: #{tpu_custom_call.1} parent=27 // pred_check_branch
          %182 = sbr.rel (%p180) target = $region32
        $region31: #{tpu_custom_call.1} parent=27 // pred_region
          %s183 = sand.u32 %s27, 1
          %s184 = scalar_lea.sflag [#allocation3], %s183
          %s185 = sand.u32 %s27, 1
          %s186 = smul.addr %s185, 8
          %s187 = scalar_lea.vmem [#allocation2], %s186
          %s189 = ssub.s32 128, 128
          %190 = vsyncadd %s184, %s189
          %s191 = smul.addr %s17, 128
          %s192 = scalar_lea.hbm %s0, %s191
          %s194 = sshll.u32 %s187, 4
          %s195 = int_to_ptr.vmem [resolvable:$true] %s194
          %197 = dma.hbm_to_vmem [thread:$0]  %s192, 128, %s195, %s184
        $region32: #{tpu_custom_call.1} parent=27 // pred_fallthru
          _
      $region28: #{tpu_custom_call.1} parent=5 // pred_fallthru
        _
      %p198 = scmp.le.s32.totalorder 1, %s17
      %p199 = scmp.lt.s32.totalorder %s17, 3
      %p200 = pnand %p198, %p199
      %p201 = pneg %p200
      // Predicated region
      $region33: #{tpu_custom_call.1} parent=5 // pred_check
        _
      $region34: #{tpu_custom_call.1} parent=5 // pred_check_branch
        %203 = sbr.rel (%p200) target = $region36
      $region35: #{tpu_custom_call.1} parent=5 // pred_region
        %s204 = ssub.s32 %s17, 1
        %s205 = sand.u32 %s30, 1
        %s206 = scalar_lea.sflag [#allocation3], %s205
        %s207 = sand.u32 %s30, 1
        %s208 = smul.addr %s207, 8
        %s209 = scalar_lea.vmem [#allocation2], %s208
        // Predicated region
        $region37: #{tpu_custom_call.1} parent=35 // pred_check
          %p210 = pneg %p43
        $region38: #{tpu_custom_call.1} parent=35 // pred_check_branch
          %212 = sbr.rel (%p210) target = $region40
        $region39: #{tpu_custom_call.1} parent=35 // pred_region
          %213 = dma.done %s206, 128
        $region40: #{tpu_custom_call.1} parent=35 // pred_fallthru
          _
        // Predicated region
        $region41: #{tpu_custom_call.1} parent=35 // pred_check
          %p214 = pneg %p64
        $region42: #{tpu_custom_call.1} parent=35 // pred_check_branch
          %216 = sbr.rel (%p214) target = $region44
        $region43: #{tpu_custom_call.1} parent=35 // pred_region
          %217 = dma.done [#allocation6], 24576
        $region44: #{tpu_custom_call.1} parent=35 // pred_fallthru
          _
        // Predicated region
        $region45: #{tpu_custom_call.1} parent=35 // pred_check
          %p218 = pneg %p85
        $region46: #{tpu_custom_call.1} parent=35 // pred_check_branch
          %220 = sbr.rel (%p218) target = $region48
        $region47: #{tpu_custom_call.1} parent=35 // pred_region
          %221 = dma.done [#allocation6], 8192
        $region48: #{tpu_custom_call.1} parent=35 // pred_fallthru
          _
        %s222 = sand.u32 %s30, 1
        %s223 = scalar_lea.sflag [#allocation3], %s222
        %s224 = sand.u32 %s30, 1
        %s225 = smul.addr %s224, 8
        %s226 = scalar_lea.vmem [#allocation2], %s225
        %p227 = pneg %p43
        %p228 = pneg %p40
        %p229 = pneg %p64
        %p230 = pneg %p61
        %p231 = pneg %p85
        %p232 = pneg %p82
        %p233 = pneg %p106
        %p234 = pneg %p103
        %p235 = pneg %p132
        %p236 = pneg %p129
        %s237 = sand.u32 %s119, 1
        %s238 = scalar_lea.sflag [#allocation4], %s237
        %s239 = sand.u32 %s119, 1
        %s240 = smul.addr %s239, 8
        %s241 = scalar_lea.vmem [#allocation8], %s240
        %v242 = vld [vmem:[%s209] sm:$0xff]
        %v243 = vld [vmem:[#allocation5] sm:$0xff]
        %v244 = vld [vmem:[#allocation5 + $0x8] sm:$0xff]
        %v245 = vld [vmem:[#allocation5 + $0x10] sm:$0xff]
        %v246 = vld [vmem:[#allocation5 + $0x18] sm:$0xff]
        %v247 = vld [vmem:[#allocation5 + $0x20] sm:$0xff]
        %v248 = vld [vmem:[#allocation5 + $0x28] sm:$0xff]
        %v249 = vld [vmem:[#allocation5 + $0x30] sm:$0xff]
        %v250 = vld [vmem:[#allocation5 + $0x38] sm:$0xff]
        %v251 = vld [vmem:[#allocation5 + $0x40] sm:$0xff]
        %v252 = vld [vmem:[#allocation5 + $0x48] sm:$0xff]
        %v253 = vld [vmem:[#allocation5 + $0x50] sm:$0xff]
        %v254 = vld [vmem:[#allocation5 + $0x58] sm:$0xff]
        %v255 = vld [vmem:[#allocation5 + $0x60] sm:$0xff]
        %v256 = vld [vmem:[#allocation5 + $0x68] sm:$0xff]
        %v257 = vld [vmem:[#allocation5 + $0x70] sm:$0xff]
        %v258 = vld [vmem:[#allocation5 + $0x78] sm:$0xff]
        %v259 = vld [vmem:[#allocation5 + $0x80] sm:$0xff]
        %v260 = vld [vmem:[#allocation5 + $0x88] sm:$0xff]
        %v261 = vld [vmem:[#allocation5 + $0x90] sm:$0xff]
        %v262 = vld [vmem:[#allocation5 + $0x98] sm:$0xff]
        %v263 = vld [vmem:[#allocation5 + $0xa0] sm:$0xff]
        %v264 = vld [vmem:[#allocation5 + $0xa8] sm:$0xff]
        %v265 = vld [vmem:[#allocation5 + $0xb0] sm:$0xff]
        %v266 = vld [vmem:[#allocation5 + $0xb8] sm:$0xff]
        %v267 = vld [vmem:[#allocation5 + $0xc0] sm:$0xff]
        %v268 = vld [vmem:[#allocation5 + $0xc8] sm:$0xff]
        %v269 = vld [vmem:[#allocation5 + $0xd0] sm:$0xff]
        %v270 = vld [vmem:[#allocation5 + $0xd8] sm:$0xff]
        %v271 = vld [vmem:[#allocation5 + $0xe0] sm:$0xff]
        %v272 = vld [vmem:[#allocation5 + $0xe8] sm:$0xff]
        %v273 = vld [vmem:[#allocation5 + $0xf0] sm:$0xff]
        %v274 = vld [vmem:[#allocation5 + $0xf8] sm:$0xff]
        %v275 = vld [vmem:[#allocation5 + $0x100] sm:$0xff]
        %v276 = vld [vmem:[#allocation5 + $0x108] sm:$0xff]
        %v277 = vld [vmem:[#allocation5 + $0x110] sm:$0xff]
        %v278 = vld [vmem:[#allocation5 + $0x118] sm:$0xff]
        %v279 = vld [vmem:[#allocation5 + $0x120] sm:$0xff]
        %v280 = vld [vmem:[#allocation5 + $0x128] sm:$0xff]
        %v281 = vld [vmem:[#allocation5 + $0x130] sm:$0xff]
        %v282 = vld [vmem:[#allocation5 + $0x138] sm:$0xff]
        %v283 = vld [vmem:[#allocation5 + $0x140] sm:$0xff]
        %v284 = vld [vmem:[#allocation5 + $0x148] sm:$0xff]
        %v285 = vld [vmem:[#allocation5 + $0x150] sm:$0xff]
        %v286 = vld [vmem:[#allocation5 + $0x158] sm:$0xff]
        %v287 = vld [vmem:[#allocation5 + $0x160] sm:$0xff]
        %v288 = vld [vmem:[#allocation5 + $0x168] sm:$0xff]
        %v289 = vld [vmem:[#allocation5 + $0x170] sm:$0xff]
        %v290 = vld [vmem:[#allocation5 + $0x178] sm:$0xff]
        %v291 = vld [vmem:[#allocation5 + $0x180] sm:$0xff]
        %v292 = vld [vmem:[#allocation5 + $0x188] sm:$0xff]
        %v293 = vld [vmem:[#allocation5 + $0x190] sm:$0xff]
        %v294 = vld [vmem:[#allocation5 + $0x198] sm:$0xff]
        %v295 = vld [vmem:[#allocation5 + $0x1a0] sm:$0xff]
        %v296 = vld [vmem:[#allocation5 + $0x1a8] sm:$0xff]
        %v297 = vld [vmem:[#allocation5 + $0x1b0] sm:$0xff]
        %v298 = vld [vmem:[#allocation5 + $0x1b8] sm:$0xff]
        %v299 = vld [vmem:[#allocation5 + $0x1c0] sm:$0xff]
        %v300 = vld [vmem:[#allocation5 + $0x1c8] sm:$0xff]
        %v301 = vld [vmem:[#allocation5 + $0x1d0] sm:$0xff]
        %v302 = vld [vmem:[#allocation5 + $0x1d8] sm:$0xff]
        %v303 = vld [vmem:[#allocation5 + $0x1e0] sm:$0xff]
        %v304 = vld [vmem:[#allocation5 + $0x1e8] sm:$0xff]
        %v305 = vld [vmem:[#allocation5 + $0x1f0] sm:$0xff]
        %v306 = vld [vmem:[#allocation5 + $0x1f8] sm:$0xff]
        %v307 = vld [vmem:[#allocation5 + $0x200] sm:$0xff]
        %v308 = vld [vmem:[#allocation5 + $0x208] sm:$0xff]
        %v309 = vld [vmem:[#allocation5 + $0x210] sm:$0xff]
        %v310 = vld [vmem:[#allocation5 + $0x218] sm:$0xff]
        %v311 = vld [vmem:[#allocation5 + $0x220] sm:$0xff]
        %v312 = vld [vmem:[#allocation5 + $0x228] sm:$0xff]
        %v313 = vld [vmem:[#allocation5 + $0x230] sm:$0xff]
        %v314 = vld [vmem:[#allocation5 + $0x238] sm:$0xff]
        %v315 = vld [vmem:[#allocation5 + $0x240] sm:$0xff]
        %v316 = vld [vmem:[#allocation5 + $0x248] sm:$0xff]
        %v317 = vld [vmem:[#allocation5 + $0x250] sm:$0xff]
        %v318 = vld [vmem:[#allocation5 + $0x258] sm:$0xff]
        %v319 = vld [vmem:[#allocation5 + $0x260] sm:$0xff]
        %v320 = vld [vmem:[#allocation5 + $0x268] sm:$0xff]
        %v321 = vld [vmem:[#allocation5 + $0x270] sm:$0xff]
        %v322 = vld [vmem:[#allocation5 + $0x278] sm:$0xff]
        %v323 = vld [vmem:[#allocation5 + $0x280] sm:$0xff]
        %v324 = vld [vmem:[#allocation5 + $0x288] sm:$0xff]
        %v325 = vld [vmem:[#allocation5 + $0x290] sm:$0xff]
        %v326 = vld [vmem:[#allocation5 + $0x298] sm:$0xff]
        %v327 = vld [vmem:[#allocation5 + $0x2a0] sm:$0xff]
        %v328 = vld [vmem:[#allocation5 + $0x2a8] sm:$0xff]
        %v329 = vld [vmem:[#allocation5 + $0x2b0] sm:$0xff]
        %v330 = vld [vmem:[#allocation5 + $0x2b8] sm:$0xff]
        %v331 = vld [vmem:[#allocation5 + $0x2c0] sm:$0xff]
        %v332 = vld [vmem:[#allocation5 + $0x2c8] sm:$0xff]
        %v333 = vld [vmem:[#allocation5 + $0x2d0] sm:$0xff]
        %v334 = vld [vmem:[#allocation5 + $0x2d8] sm:$0xff]
        %v335 = vld [vmem:[#allocation5 + $0x2e0] sm:$0xff]
        %v336 = vld [vmem:[#allocation5 + $0x2e8] sm:$0xff]
        %v337 = vld [vmem:[#allocation5 + $0x2f0] sm:$0xff]
        %v338 = vld [vmem:[#allocation5 + $0x2f8] sm:$0xff]
        %v339 = vld [vmem:[#allocation5 + $0x300] sm:$0xff]
        %v340 = vld [vmem:[#allocation5 + $0x308] sm:$0xff]
        %v341 = vld [vmem:[#allocation5 + $0x310] sm:$0xff]
        %v342 = vld [vmem:[#allocation5 + $0x318] sm:$0xff]
        %v343 = vld [vmem:[#allocation5 + $0x320] sm:$0xff]
        %v344 = vld [vmem:[#allocation5 + $0x328] sm:$0xff]
        %v345 = vld [vmem:[#allocation5 + $0x330] sm:$0xff]
        %v346 = vld [vmem:[#allocation5 + $0x338] sm:$0xff]
        %v347 = vld [vmem:[#allocation5 + $0x340] sm:$0xff]
        %v348 = vld [vmem:[#allocation5 + $0x348] sm:$0xff]
        %v349 = vld [vmem:[#allocation5 + $0x350] sm:$0xff]
        %v350 = vld [vmem:[#allocation5 + $0x358] sm:$0xff]
        %v351 = vld [vmem:[#allocation5 + $0x360] sm:$0xff]
        %v352 = vld [vmem:[#allocation5 + $0x368] sm:$0xff]
        %v353 = vld [vmem:[#allocation5 + $0x370] sm:$0xff]
        %v354 = vld [vmem:[#allocation5 + $0x378] sm:$0xff]
        %v355 = vld [vmem:[#allocation5 + $0x380] sm:$0xff]
        %v356 = vld [vmem:[#allocation5 + $0x388] sm:$0xff]
        %v357 = vld [vmem:[#allocation5 + $0x390] sm:$0xff]
        %v358 = vld [vmem:[#allocation5 + $0x398] sm:$0xff]
        %v359 = vld [vmem:[#allocation5 + $0x3a0] sm:$0xff]
        %v360 = vld [vmem:[#allocation5 + $0x3a8] sm:$0xff]
        %v361 = vld [vmem:[#allocation5 + $0x3b0] sm:$0xff]
        %v362 = vld [vmem:[#allocation5 + $0x3b8] sm:$0xff]
        %v363 = vld [vmem:[#allocation5 + $0x3c0] sm:$0xff]
        %v364 = vld [vmem:[#allocation5 + $0x3c8] sm:$0xff]
        %v365 = vld [vmem:[#allocation5 + $0x3d0] sm:$0xff]
        %v366 = vld [vmem:[#allocation5 + $0x3d8] sm:$0xff]
        %v367 = vld [vmem:[#allocation5 + $0x3e0] sm:$0xff]
        %v368 = vld [vmem:[#allocation5 + $0x3e8] sm:$0xff]
        %v369 = vld [vmem:[#allocation5 + $0x3f0] sm:$0xff]
        %v370 = vld [vmem:[#allocation5 + $0x3f8] sm:$0xff]
        %v371 = vld [vmem:[#allocation5 + $0x400] sm:$0xff]
        %v372 = vld [vmem:[#allocation5 + $0x408] sm:$0xff]
        %v373 = vld [vmem:[#allocation5 + $0x410] sm:$0xff]
        %v374 = vld [vmem:[#allocation5 + $0x418] sm:$0xff]
        %v375 = vld [vmem:[#allocation5 + $0x420] sm:$0xff]
        %v376 = vld [vmem:[#allocation5 + $0x428] sm:$0xff]
        %v377 = vld [vmem:[#allocation5 + $0x430] sm:$0xff]
        %v378 = vld [vmem:[#allocation5 + $0x438] sm:$0xff]
        %v379 = vld [vmem:[#allocation5 + $0x440] sm:$0xff]
        %v380 = vld [vmem:[#allocation5 + $0x448] sm:$0xff]
        %v381 = vld [vmem:[#allocation5 + $0x450] sm:$0xff]
        %v382 = vld [vmem:[#allocation5 + $0x458] sm:$0xff]
        %v383 = vld [vmem:[#allocation5 + $0x460] sm:$0xff]
        %v384 = vld [vmem:[#allocation5 + $0x468] sm:$0xff]
        %v385 = vld [vmem:[#allocation5 + $0x470] sm:$0xff]
        %v386 = vld [vmem:[#allocation5 + $0x478] sm:$0xff]
        %v387 = vld [vmem:[#allocation5 + $0x480] sm:$0xff]
        %v388 = vld [vmem:[#allocation5 + $0x488] sm:$0xff]
        %v389 = vld [vmem:[#allocation5 + $0x490] sm:$0xff]
        %v390 = vld [vmem:[#allocation5 + $0x498] sm:$0xff]
        %v391 = vld [vmem:[#allocation5 + $0x4a0] sm:$0xff]
        %v392 = vld [vmem:[#allocation5 + $0x4a8] sm:$0xff]
        %v393 = vld [vmem:[#allocation5 + $0x4b0] sm:$0xff]
        %v394 = vld [vmem:[#allocation5 + $0x4b8] sm:$0xff]
        %v395 = vld [vmem:[#allocation5 + $0x4c0] sm:$0xff]
        %v396 = vld [vmem:[#allocation5 + $0x4c8] sm:$0xff]
        %v397 = vld [vmem:[#allocation5 + $0x4d0] sm:$0xff]
        %v398 = vld [vmem:[#allocation5 + $0x4d8] sm:$0xff]
        %v399 = vld [vmem:[#allocation5 + $0x4e0] sm:$0xff]
        %v400 = vld [vmem:[#allocation5 + $0x4e8] sm:$0xff]
        %v401 = vld [vmem:[#allocation5 + $0x4f0] sm:$0xff]
        %v402 = vld [vmem:[#allocation5 + $0x4f8] sm:$0xff]
        %v403 = vld [vmem:[#allocation5 + $0x500] sm:$0xff]
        %v404 = vld [vmem:[#allocation5 + $0x508] sm:$0xff]
        %v405 = vld [vmem:[#allocation5 + $0x510] sm:$0xff]
        %v406 = vld [vmem:[#allocation5 + $0x518] sm:$0xff]
        %v407 = vld [vmem:[#allocation5 + $0x520] sm:$0xff]
        %v408 = vld [vmem:[#allocation5 + $0x528] sm:$0xff]
        %v409 = vld [vmem:[#allocation5 + $0x530] sm:$0xff]
        %v410 = vld [vmem:[#allocation5 + $0x538] sm:$0xff]
        %v411 = vld [vmem:[#allocation5 + $0x540] sm:$0xff]
        %v412 = vld [vmem:[#allocation5 + $0x548] sm:$0xff]
        %v413 = vld [vmem:[#allocation5 + $0x550] sm:$0xff]
        %v414 = vld [vmem:[#allocation5 + $0x558] sm:$0xff]
        %v415 = vld [vmem:[#allocation5 + $0x560] sm:$0xff]
        %v416 = vld [vmem:[#allocation5 + $0x568] sm:$0xff]
        %v417 = vld [vmem:[#allocation5 + $0x570] sm:$0xff]
        %v418 = vld [vmem:[#allocation5 + $0x578] sm:$0xff]
        %v419 = vld [vmem:[#allocation5 + $0x580] sm:$0xff]
        %v420 = vld [vmem:[#allocation5 + $0x588] sm:$0xff]
        %v421 = vld [vmem:[#allocation5 + $0x590] sm:$0xff]
        %v422 = vld [vmem:[#allocation5 + $0x598] sm:$0xff]
        %v423 = vld [vmem:[#allocation5 + $0x5a0] sm:$0xff]
        %v424 = vld [vmem:[#allocation5 + $0x5a8] sm:$0xff]
        %v425 = vld [vmem:[#allocation5 + $0x5b0] sm:$0xff]
        %v426 = vld [vmem:[#allocation5 + $0x5b8] sm:$0xff]
        %v427 = vld [vmem:[#allocation5 + $0x5c0] sm:$0xff]
        %v428 = vld [vmem:[#allocation5 + $0x5c8] sm:$0xff]
        %v429 = vld [vmem:[#allocation5 + $0x5d0] sm:$0xff]
        %v430 = vld [vmem:[#allocation5 + $0x5d8] sm:$0xff]
        %v431 = vld [vmem:[#allocation5 + $0x5e0] sm:$0xff]
        %v432 = vld [vmem:[#allocation5 + $0x5e8] sm:$0xff]
        %v433 = vld [vmem:[#allocation5 + $0x5f0] sm:$0xff]
        %v434 = vld [vmem:[#allocation5 + $0x5f8] sm:$0xff]
        %v435 = vld [vmem:[%s3] sm:$0x1]
        %436 = vmatprep.subr.mxu0 %v244
        %437 = vmatpush1.msra.mxu0 %v243
        %438 = vmatprep.subr.mxu0 %v256
        %439 = vmatpush1.msra.mxu0 %v255
        %440 = vmatprep.subr.mxu0 %v268
        %441 = vmatpush1.msra.mxu0 %v267
        %442 = vmatprep.subr.mxu0 %v280
        %443 = vmatpush1.msra.mxu0 %v279
        %444 = vmatprep.subr.mxu0 %v292
        %445 = vmatpush1.msra.mxu0 %v291
        %446 = vmatprep.subr.mxu0 %v304
        %447 = vmatpush1.msra.mxu0 %v303
        %448 = vmatprep.subr.mxu0 %v316
        %449 = vmatpush1.msra.mxu0 %v315
        %450 = vmatprep.subr.mxu0 %v328
        %451 = vmatpush1.msra.mxu0 %v327
        %452 = vmatprep.subr.mxu0 %v340
        %453 = vmatpush1.msra.mxu0 %v339
        %454 = vmatprep.subr.mxu0 %v352
        %455 = vmatpush1.msra.mxu0 %v351
        %456 = vmatprep.subr.mxu0 %v364
        %457 = vmatpush1.msra.mxu0 %v363
        %458 = vmatprep.subr.mxu0 %v376
        %459 = vmatpush1.msra.mxu0 %v375
        %460 = vmatprep.subr.mxu0 %v388
        %461 = vmatpush1.msra.mxu0 %v387
        %462 = vmatprep.subr.mxu0 %v400
        %463 = vmatpush1.msra.mxu0 %v399
        %464 = vmatprep.subr.mxu0 %v412
        %465 = vmatpush1.msra.mxu0 %v411
        %466 = vmatprep.subr.mxu0 %v424
        %467 = vmatpush1.msra.mxu0 %v423
        %468 = vmatprep.subr.mxu0 0.0
        %469 = vmatpush1.msra.mxu0 0.0
        %470 = vmatprep.subr.mxu0 0.0
        %471 = vmatpush1.msra.mxu0 0.0
        %472 = vmatprep.subr.mxu0 0.0
        %473 = vmatpush1.msra.mxu0 0.0
        %474 = vmatprep.subr.mxu0 0.0
        %475 = vmatpush1.msra.mxu0 0.0
        %476 = vmatprep.subr.mxu0 0.0
        %477 = vmatpush1.msra.mxu0 0.0
        %478 = vmatprep.subr.mxu0 0.0
        %479 = vmatpush1.msra.mxu0 0.0
        %480 = vmatprep.subr.mxu0 0.0
        %481 = vmatpush1.msra.mxu0 0.0
        %482 = vmatprep.subr.mxu0 0.0
        %483 = vmatpush1.msra.mxu0 0.0
        %484 = vmatprep.subr.mxu0 0.0
        %485 = vmatpush1.msra.mxu0 0.0
        %486 = vmatprep.subr.mxu0 0.0
        %487 = vmatpush1.msra.mxu0 0.0
        %488 = vmatprep.subr.mxu0 0.0
        %489 = vmatpush1.msra.mxu0 0.0
        %490 = vmatprep.subr.mxu0 0.0
        %491 = vmatpush1.msra.mxu0 0.0
        %492 = vmatprep.subr.mxu0 0.0
        %493 = vmatpush1.msra.mxu0 0.0
        %494 = vmatprep.subr.mxu0 0.0
        %495 = vmatpush1.msra.mxu0 0.0
        %496 = vmatprep.subr.mxu0 0.0
        %497 = vmatpush1.msra.mxu0 0.0
        %498 = vmatprep.subr.mxu0 0.0
        %499 = vmatpush1.msra.mxu0 0.0
        %500 = vmatprep.mubr.f32.mxu0 0.0
        %501 = vmatmul.mubr.f32.gmra.mrb[0].mxu0 %v242
        %v502 = vpop.f32.mrb[0].mxu0
        %v503 = vadd.f32 0.0, %v502
        %v504 = vpop.f32.mrb[0].mxu0
        %v505 = vadd.f32 0.0, %v504
        %506 = vdwg.mxu0
        %507 = vmatprep.subr.mxu0 %v246
        %508 = vmatpush1.msra.mxu0 %v245
        %509 = vmatprep.subr.mxu0 %v258
        %510 = vmatpush1.msra.mxu0 %v257
        %511 = vmatprep.subr.mxu0 %v270
        %512 = vmatpush1.msra.mxu0 %v269
        %513 = vmatprep.subr.mxu0 %v282
        %514 = vmatpush1.msra.mxu0 %v281
        %515 = vmatprep.subr.mxu0 %v294
        %516 = vmatpush1.msra.mxu0 %v293
        %517 = vmatprep.subr.mxu0 %v306
        %518 = vmatpush1.msra.mxu0 %v305
        %519 = vmatprep.subr.mxu0 %v318
        %520 = vmatpush1.msra.mxu0 %v317
        %521 = vmatprep.subr.mxu0 %v330
        %522 = vmatpush1.msra.mxu0 %v329
        %523 = vmatprep.subr.mxu0 %v342
        %524 = vmatpush1.msra.mxu0 %v341
        %525 = vmatprep.subr.mxu0 %v354
        %526 = vmatpush1.msra.mxu0 %v353
        %527 = vmatprep.subr.mxu0 %v366
        %528 = vmatpush1.msra.mxu0 %v365
        %529 = vmatprep.subr.mxu0 %v378
        %530 = vmatpush1.msra.mxu0 %v377
        %531 = vmatprep.subr.mxu0 %v390
        %532 = vmatpush1.msra.mxu0 %v389
        %533 = vmatprep.subr.mxu0 %v402
        %534 = vmatpush1.msra.mxu0 %v401
        %535 = vmatprep.subr.mxu0 %v414
        %536 = vmatpush1.msra.mxu0 %v413
        %537 = vmatprep.subr.mxu0 %v426
        %538 = vmatpush1.msra.mxu0 %v425
        %539 = vmatprep.subr.mxu0 0.0
        %540 = vmatpush1.msra.mxu0 0.0
        %541 = vmatprep.subr.mxu0 0.0
        %542 = vmatpush1.msra.mxu0 0.0
        %543 = vmatprep.subr.mxu0 0.0
        %544 = vmatpush1.msra.mxu0 0.0
        %545 = vmatprep.subr.mxu0 0.0
        %546 = vmatpush1.msra.mxu0 0.0
        %547 = vmatprep.subr.mxu0 0.0
        %548 = vmatpush1.msra.mxu0 0.0
        %549 = vmatprep.subr.mxu0 0.0
        %550 = vmatpush1.msra.mxu0 0.0
        %551 = vmatprep.subr.mxu0 0.0
        %552 = vmatpush1.msra.mxu0 0.0
        %553 = vmatprep.subr.mxu0 0.0
        %554 = vmatpush1.msra.mxu0 0.0
        %555 = vmatprep.subr.mxu0 0.0
        %556 = vmatpush1.msra.mxu0 0.0
        %557 = vmatprep.subr.mxu0 0.0
        %558 = vmatpush1.msra.mxu0 0.0
        %559 = vmatprep.subr.mxu0 0.0
        %560 = vmatpush1.msra.mxu0 0.0
        %561 = vmatprep.subr.mxu0 0.0
        %562 = vmatpush1.msra.mxu0 0.0
        %563 = vmatprep.subr.mxu0 0.0
        %564 = vmatpush1.msra.mxu0 0.0
        %565 = vmatprep.subr.mxu0 0.0
        %566 = vmatpush1.msra.mxu0 0.0
        %567 = vmatprep.subr.mxu0 0.0
        %568 = vmatpush1.msra.mxu0 0.0
        %569 = vmatprep.subr.mxu0 0.0
        %570 = vmatpush1.msra.mxu0 0.0
        %571 = vmatprep.mubr.f32.mxu0 0.0
        %572 = vmatmul.mubr.f32.gmra.mrb[0].mxu0 %v242
        %v573 = vpop.f32.mrb[0].mxu0
        %v574 = vadd.f32 0.0, %v573
        %v575 = vpop.f32.mrb[0].mxu0
        %v576 = vadd.f32 0.0, %v575
        %577 = vdwg.mxu0
        %578 = vmatprep.subr.mxu0 %v248
        %579 = vmatpush1.msra.mxu0 %v247
        %580 = vmatprep.subr.mxu0 %v260
        %581 = vmatpush1.msra.mxu0 %v259
        %582 = vmatprep.subr.mxu0 %v272
        %583 = vmatpush1.msra.mxu0 %v271
        %584 = vmatprep.subr.mxu0 %v284
        %585 = vmatpush1.msra.mxu0 %v283
        %586 = vmatprep.subr.mxu0 %v296
        %587 = vmatpush1.msra.mxu0 %v295
        %588 = vmatprep.subr.mxu0 %v308
        %589 = vmatpush1.msra.mxu0 %v307
        %590 = vmatprep.subr.mxu0 %v320
        %591 = vmatpush1.msra.mxu0 %v319
        %592 = vmatprep.subr.mxu0 %v332
        %593 = vmatpush1.msra.mxu0 %v331
        %594 = vmatprep.subr.mxu0 %v344
        %595 = vmatpush1.msra.mxu0 %v343
        %596 = vmatprep.subr.mxu0 %v356
        %597 = vmatpush1.msra.mxu0 %v355
        %598 = vmatprep.subr.mxu0 %v368
        %599 = vmatpush1.msra.mxu0 %v367
        %600 = vmatprep.subr.mxu0 %v380
        %601 = vmatpush1.msra.mxu0 %v379
        %602 = vmatprep.subr.mxu0 %v392
        %603 = vmatpush1.msra.mxu0 %v391
        %604 = vmatprep.subr.mxu0 %v404
        %605 = vmatpush1.msra.mxu0 %v403
        %606 = vmatprep.subr.mxu0 %v416
        %607 = vmatpush1.msra.mxu0 %v415
        %608 = vmatprep.subr.mxu0 %v428
        %609 = vmatpush1.msra.mxu0 %v427
        %610 = vmatprep.subr.mxu0 0.0
        %611 = vmatpush1.msra.mxu0 0.0
        %612 = vmatprep.subr.mxu0 0.0
        %613 = vmatpush1.msra.mxu0 0.0
        %614 = vmatprep.subr.mxu0 0.0
        %615 = vmatpush1.msra.mxu0 0.0
        %616 = vmatprep.subr.mxu0 0.0
        %617 = vmatpush1.msra.mxu0 0.0
        %618 = vmatprep.subr.mxu0 0.0
        %619 = vmatpush1.msra.mxu0 0.0
        %620 = vmatprep.subr.mxu0 0.0
        %621 = vmatpush1.msra.mxu0 0.0
        %622 = vmatprep.subr.mxu0 0.0
        %623 = vmatpush1.msra.mxu0 0.0
        %624 = vmatprep.subr.mxu0 0.0
        %625 = vmatpush1.msra.mxu0 0.0
        %626 = vmatprep.subr.mxu0 0.0
        %627 = vmatpush1.msra.mxu0 0.0
        %628 = vmatprep.subr.mxu0 0.0
        %629 = vmatpush1.msra.mxu0 0.0
        %630 = vmatprep.subr.mxu0 0.0
        %631 = vmatpush1.msra.mxu0 0.0
        %632 = vmatprep.subr.mxu0 0.0
        %633 = vmatpush1.msra.mxu0 0.0
        %634 = vmatprep.subr.mxu0 0.0
        %635 = vmatpush1.msra.mxu0 0.0
        %636 = vmatprep.subr.mxu0 0.0
        %637 = vmatpush1.msra.mxu0 0.0
        %638 = vmatprep.subr.mxu0 0.0
        %639 = vmatpush1.msra.mxu0 0.0
        %640 = vmatprep.subr.mxu0 0.0
        %641 = vmatpush1.msra.mxu0 0.0
        %642 = vmatprep.mubr.f32.mxu0 0.0
        %643 = vmatmul.mubr.f32.gmra.mrb[0].mxu0 %v242
        %v644 = vpop.f32.mrb[0].mxu0
        %v645 = vadd.f32 0.0, %v644
        %v646 = vpop.f32.mrb[0].mxu0
        %v647 = vadd.f32 0.0, %v646
        %648 = vdwg.mxu0
        %649 = vmatprep.subr.mxu0 %v250
        %650 = vmatpush1.msra.mxu0 %v249
        %651 = vmatprep.subr.mxu0 %v262
        %652 = vmatpush1.msra.mxu0 %v261
        %653 = vmatprep.subr.mxu0 %v274
        %654 = vmatpush1.msra.mxu0 %v273
        %655 = vmatprep.subr.mxu0 %v286
        %656 = vmatpush1.msra.mxu0 %v285
        %657 = vmatprep.subr.mxu0 %v298
        %658 = vmatpush1.msra.mxu0 %v297
        %659 = vmatprep.subr.mxu0 %v310
        %660 = vmatpush1.msra.mxu0 %v309
        %661 = vmatprep.subr.mxu0 %v322
        %662 = vmatpush1.msra.mxu0 %v321
        %663 = vmatprep.subr.mxu0 %v334
        %664 = vmatpush1.msra.mxu0 %v333
        %665 = vmatprep.subr.mxu0 %v346
        %666 = vmatpush1.msra.mxu0 %v345
        %667 = vmatprep.subr.mxu0 %v358
        %668 = vmatpush1.msra.mxu0 %v357
        %669 = vmatprep.subr.mxu0 %v370
        %670 = vmatpush1.msra.mxu0 %v369
        %671 = vmatprep.subr.mxu0 %v382
        %672 = vmatpush1.msra.mxu0 %v381
        %673 = vmatprep.subr.mxu0 %v394
        %674 = vmatpush1.msra.mxu0 %v393
        %675 = vmatprep.subr.mxu0 %v406
        %676 = vmatpush1.msra.mxu0 %v405
        %677 = vmatprep.subr.mxu0 %v418
        %678 = vmatpush1.msra.mxu0 %v417
        %679 = vmatprep.subr.mxu0 %v430
        %680 = vmatpush1.msra.mxu0 %v429
        %681 = vmatprep.subr.mxu0 0.0
        %682 = vmatpush1.msra.mxu0 0.0
        %683 = vmatprep.subr.mxu0 0.0
        %684 = vmatpush1.msra.mxu0 0.0
        %685 = vmatprep.subr.mxu0 0.0
        %686 = vmatpush1.msra.mxu0 0.0
        %687 = vmatprep.subr.mxu0 0.0
        %688 = vmatpush1.msra.mxu0 0.0
        %689 = vmatprep.subr.mxu0 0.0
        %690 = vmatpush1.msra.mxu0 0.0
        %691 = vmatprep.subr.mxu0 0.0
        %692 = vmatpush1.msra.mxu0 0.0
        %693 = vmatprep.subr.mxu0 0.0
        %694 = vmatpush1.msra.mxu0 0.0
        %695 = vmatprep.subr.mxu0 0.0
        %696 = vmatpush1.msra.mxu0 0.0
        %697 = vmatprep.subr.mxu0 0.0
        %698 = vmatpush1.msra.mxu0 0.0
        %699 = vmatprep.subr.mxu0 0.0
        %700 = vmatpush1.msra.mxu0 0.0
        %701 = vmatprep.subr.mxu0 0.0
        %702 = vmatpush1.msra.mxu0 0.0
        %703 = vmatprep.subr.mxu0 0.0
        %704 = vmatpush1.msra.mxu0 0.0
        %705 = vmatprep.subr.mxu0 0.0
        %706 = vmatpush1.msra.mxu0 0.0
        %707 = vmatprep.subr.mxu0 0.0
        %708 = vmatpush1.msra.mxu0 0.0
        %709 = vmatprep.subr.mxu0 0.0
        %710 = vmatpush1.msra.mxu0 0.0
        %711 = vmatprep.subr.mxu0 0.0
        %712 = vmatpush1.msra.mxu0 0.0
        %713 = vmatprep.mubr.f32.mxu0 0.0
        %714 = vmatmul.mubr.f32.gmra.mrb[0].mxu0 %v242
        %v715 = vpop.f32.mrb[0].mxu0
        %v716 = vadd.f32 0.0, %v715
        %v717 = vpop.f32.mrb[0].mxu0
        %v718 = vadd.f32 0.0, %v717
        %719 = vdwg.mxu0
        %720 = vmatprep.subr.mxu0 %v252
        %721 = vmatpush1.msra.mxu0 %v251
        %722 = vmatprep.subr.mxu0 %v264
        %723 = vmatpush1.msra.mxu0 %v263
        %724 = vmatprep.subr.mxu0 %v276
        %725 = vmatpush1.msra.mxu0 %v275
        %726 = vmatprep.subr.mxu0 %v288
        %727 = vmatpush1.msra.mxu0 %v287
        %728 = vmatprep.subr.mxu0 %v300
        %729 = vmatpush1.msra.mxu0 %v299
        %730 = vmatprep.subr.mxu0 %v312
        %731 = vmatpush1.msra.mxu0 %v311
        %732 = vmatprep.subr.mxu0 %v324
        %733 = vmatpush1.msra.mxu0 %v323
        %734 = vmatprep.subr.mxu0 %v336
        %735 = vmatpush1.msra.mxu0 %v335
        %736 = vmatprep.subr.mxu0 %v348
        %737 = vmatpush1.msra.mxu0 %v347
        %738 = vmatprep.subr.mxu0 %v360
        %739 = vmatpush1.msra.mxu0 %v359
        %740 = vmatprep.subr.mxu0 %v372
        %741 = vmatpush1.msra.mxu0 %v371
        %742 = vmatprep.subr.mxu0 %v384
        %743 = vmatpush1.msra.mxu0 %v383
        %744 = vmatprep.subr.mxu0 %v396
        %745 = vmatpush1.msra.mxu0 %v395
        %746 = vmatprep.subr.mxu0 %v408
        %747 = vmatpush1.msra.mxu0 %v407
        %748 = vmatprep.subr.mxu0 %v420
        %749 = vmatpush1.msra.mxu0 %v419
        %750 = vmatprep.subr.mxu0 %v432
        %751 = vmatpush1.msra.mxu0 %v431
        %752 = vmatprep.subr.mxu0 0.0
        %753 = vmatpush1.msra.mxu0 0.0
        %754 = vmatprep.subr.mxu0 0.0
        %755 = vmatpush1.msra.mxu0 0.0
        %756 = vmatprep.subr.mxu0 0.0
        %757 = vmatpush1.msra.mxu0 0.0
        %758 = vmatprep.subr.mxu0 0.0
        %759 = vmatpush1.msra.mxu0 0.0
        %760 = vmatprep.subr.mxu0 0.0
        %761 = vmatpush1.msra.mxu0 0.0
        %762 = vmatprep.subr.mxu0 0.0
        %763 = vmatpush1.msra.mxu0 0.0
        %764 = vmatprep.subr.mxu0 0.0
        %765 = vmatpush1.msra.mxu0 0.0
        %766 = vmatprep.subr.mxu0 0.0
        %767 = vmatpush1.msra.mxu0 0.0
        %768 = vmatprep.subr.mxu0 0.0
        %769 = vmatpush1.msra.mxu0 0.0
        %770 = vmatprep.subr.mxu0 0.0
        %771 = vmatpush1.msra.mxu0 0.0
        %772 = vmatprep.subr.mxu0 0.0
        %773 = vmatpush1.msra.mxu0 0.0
        %774 = vmatprep.subr.mxu0 0.0
        %775 = vmatpush1.msra.mxu0 0.0
        %776 = vmatprep.subr.mxu0 0.0
        %777 = vmatpush1.msra.mxu0 0.0
        %778 = vmatprep.subr.mxu0 0.0
        %779 = vmatpush1.msra.mxu0 0.0
        %780 = vmatprep.subr.mxu0 0.0
        %781 = vmatpush1.msra.mxu0 0.0
        %782 = vmatprep.subr.mxu0 0.0
        %783 = vmatpush1.msra.mxu0 0.0
        %784 = vmatprep.mubr.f32.mxu0 0.0
        %785 = vmatmul.mubr.f32.gmra.mrb[0].mxu0 %v242
        %v786 = vpop.f32.mrb[0].mxu0
        %v787 = vadd.f32 0.0, %v786
        %v788 = vpop.f32.mrb[0].mxu0
        %v789 = vadd.f32 0.0, %v788
        %790 = vdwg.mxu0
        %791 = vmatprep.subr.mxu0 %v254
        %792 = vmatpush1.msra.mxu0 %v253
        %793 = vmatprep.subr.mxu0 %v266
        %794 = vmatpush1.msra.mxu0 %v265
        %795 = vmatprep.subr.mxu0 %v278
        %796 = vmatpush1.msra.mxu0 %v277
        %797 = vmatprep.subr.mxu0 %v290
        %798 = vmatpush1.msra.mxu0 %v289
        %799 = vmatprep.subr.mxu0 %v302
        %800 = vmatpush1.msra.mxu0 %v301
        %801 = vmatprep.subr.mxu0 %v314
        %802 = vmatpush1.msra.mxu0 %v313
        %803 = vmatprep.subr.mxu0 %v326
        %804 = vmatpush1.msra.mxu0 %v325
        %805 = vmatprep.subr.mxu0 %v338
        %806 = vmatpush1.msra.mxu0 %v337
        %807 = vmatprep.subr.mxu0 %v350
        %808 = vmatpush1.msra.mxu0 %v349
        %809 = vmatprep.subr.mxu0 %v362
        %810 = vmatpush1.msra.mxu0 %v361
        %811 = vmatprep.subr.mxu0 %v374
        %812 = vmatpush1.msra.mxu0 %v373
        %813 = vmatprep.subr.mxu0 %v386
        %814 = vmatpush1.msra.mxu0 %v385
        %815 = vmatprep.subr.mxu0 %v398
        %816 = vmatpush1.msra.mxu0 %v397
        %817 = vmatprep.subr.mxu0 %v410
        %818 = vmatpush1.msra.mxu0 %v409
        %819 = vmatprep.subr.mxu0 %v422
        %820 = vmatpush1.msra.mxu0 %v421
        %821 = vmatprep.subr.mxu0 %v434
        %822 = vmatpush1.msra.mxu0 %v433
        %823 = vmatprep.subr.mxu0 0.0
        %824 = vmatpush1.msra.mxu0 0.0
        %825 = vmatprep.subr.mxu0 0.0
        %826 = vmatpush1.msra.mxu0 0.0
        %827 = vmatprep.subr.mxu0 0.0
        %828 = vmatpush1.msra.mxu0 0.0
        %829 = vmatprep.subr.mxu0 0.0
        %830 = vmatpush1.msra.mxu0 0.0
        %831 = vmatprep.subr.mxu0 0.0
        %832 = vmatpush1.msra.mxu0 0.0
        %833 = vmatprep.subr.mxu0 0.0
        %834 = vmatpush1.msra.mxu0 0.0
        %835 = vmatprep.subr.mxu0 0.0
        %836 = vmatpush1.msra.mxu0 0.0
        %837 = vmatprep.subr.mxu0 0.0
        %838 = vmatpush1.msra.mxu0 0.0
        %839 = vmatprep.subr.mxu0 0.0
        %840 = vmatpush1.msra.mxu0 0.0
        %841 = vmatprep.subr.mxu0 0.0
        %842 = vmatpush1.msra.mxu0 0.0
        %843 = vmatprep.subr.mxu0 0.0
        %844 = vmatpush1.msra.mxu0 0.0
        %845 = vmatprep.subr.mxu0 0.0
        %846 = vmatpush1.msra.mxu0 0.0
        %847 = vmatprep.subr.mxu0 0.0
        %848 = vmatpush1.msra.mxu0 0.0
        %849 = vmatprep.subr.mxu0 0.0
        %850 = vmatpush1.msra.mxu0 0.0
        %851 = vmatprep.subr.mxu0 0.0
        %852 = vmatpush1.msra.mxu0 0.0
        %853 = vmatprep.subr.mxu0 0.0
        %854 = vmatpush1.msra.mxu0 0.0
        %855 = vmatprep.mubr.f32.mxu0 0.0
        %856 = vmatmul.mubr.f32.gmra.mrb[0].mxu0 %v242
        %v857 = vpop.f32.mrb[0].mxu0
        %v858 = vadd.f32 0.0, %v857
        %v859 = vpop.f32.mrb[0].mxu0
        %v860 = vadd.f32 0.0, %v859
        %861 = vdwg.mxu0
        %v862 = vlaneseq
        %v863 = vshrl.u32 %v862, 7
        %v864 = vlaneseq
        %v865 = vand.u32 %v864, 127
        %vm866 = vcmp.le.s32.totalorder %v865, %v863
        %867 = vmatprep.subr.mxu0 0.0
        %868 = vmatpush1.xpose.msra.mxu0 %v505
        %869 = vmatprep.subr.mxu0 0.0
        %870 = vmatpush1.xpose.msra.mxu0 0.0
        %871 = vmatprep.subr.mxu0 0.0
        %872 = vmatpush1.xpose.msra.mxu0 0.0
        %873 = vmatprep.subr.mxu0 0.0
        %874 = vmatpush1.xpose.msra.mxu0 0.0
        %875 = vmatprep.subr.mxu0 0.0
        %876 = vmatpush1.xpose.msra.mxu0 0.0
        %877 = vmatprep.subr.mxu0 0.0
        %878 = vmatpush1.xpose.msra.mxu0 0.0
        %879 = vmatprep.subr.mxu0 0.0
        %880 = vmatpush1.xpose.msra.mxu0 0.0
        %881 = vmatprep.subr.mxu0 0.0
        %882 = vmatpush1.xpose.msra.mxu0 0.0
        %883 = vmatprep.subr.mxu0 0.0
        %884 = vmatpush1.xpose.msra.mxu0 0.0
        %885 = vmatprep.subr.mxu0 0.0
        %886 = vmatpush1.xpose.msra.mxu0 0.0
        %887 = vmatprep.subr.mxu0 0.0
        %888 = vmatpush1.xpose.msra.mxu0 0.0
        %889 = vmatprep.subr.mxu0 0.0
        %890 = vmatpush1.xpose.msra.mxu0 0.0
        %891 = vmatprep.subr.mxu0 0.0
        %892 = vmatpush1.xpose.msra.mxu0 0.0
        %893 = vmatprep.subr.mxu0 0.0
        %894 = vmatpush1.xpose.msra.mxu0 0.0
        %895 = vmatprep.subr.mxu0 0.0
        %896 = vmatpush1.xpose.msra.mxu0 0.0
        %897 = vmatprep.subr.mxu0 0.0
        %898 = vmatpush1.xpose.msra.mxu0 0.0
        %899 = vmatprep.subr.mxu0 0.0
        %900 = vmatpush1.xpose.msra.mxu0 0.0
        %901 = vmatprep.subr.mxu0 0.0
        %902 = vmatpush1.xpose.msra.mxu0 0.0
        %903 = vmatprep.subr.mxu0 0.0
        %904 = vmatpush1.xpose.msra.mxu0 0.0
        %905 = vmatprep.subr.mxu0 0.0
        %906 = vmatpush1.xpose.msra.mxu0 0.0
        %907 = vmatprep.subr.mxu0 0.0
        %908 = vmatpush1.xpose.msra.mxu0 0.0
        %909 = vmatprep.subr.mxu0 0.0
        %910 = vmatpush1.xpose.msra.mxu0 0.0
        %911 = vmatprep.subr.mxu0 0.0
        %912 = vmatpush1.xpose.msra.mxu0 0.0
        %913 = vmatprep.subr.mxu0 0.0
        %914 = vmatpush1.xpose.msra.mxu0 0.0
        %915 = vmatprep.subr.mxu0 0.0
        %916 = vmatpush1.xpose.msra.mxu0 0.0
        %917 = vmatprep.subr.mxu0 0.0
        %918 = vmatpush1.xpose.msra.mxu0 0.0
        %919 = vmatprep.subr.mxu0 0.0
        %920 = vmatpush1.xpose.msra.mxu0 0.0
        %921 = vmatprep.subr.mxu0 0.0
        %922 = vmatpush1.xpose.msra.mxu0 0.0
        %923 = vmatprep.subr.mxu0 0.0
        %924 = vmatpush1.xpose.msra.mxu0 0.0
        %925 = vmatprep.subr.mxu0 0.0
        %926 = vmatpush1.xpose.msra.mxu0 0.0
        %927 = vmatprep.subr.mxu0 0.0
        %928 = vmatpush1.xpose.msra.mxu0 0.0
        %929 = vmatprep.subr.mxu0 0.0
        %930 = vmatpush1.xpose.msra.mxu0 0.0
        %931 = vmatprep.mubr.f32.mxu0 0.0
        %932 = vmatmul.mubr.f32.gmra.mrb[0].mxu0 %v503
        %v933 = vpop.f32.mrb[0].mxu0
        %v934 = vadd.f32 0.0, %v933
        %v935 = vpop.f32.mrb[0].mxu0
        %936 = vdwg.mxu0
        %v937 = vsel %vm866, %v934, -1e+30
        %vm938 = vcmask 64512
        %v939 = vsel %vm938, %v937, -inf
        %940 = vmax.xlane.f32.xlu0 %v939
        %v941 = vpop.xlane.xlu0 %940
        %v942 = vsub.f32 %v937, %v941
        %v943 = vmul.f32 %v942, 1.442695
        %v944 = vpow.pop %v943
        %v945 = vsel %vm938, %v944, 0.0
        %946 = vadd.xlane.f32.xlu0 %v945
        %v947 = vpop.xlane.xlu0 %946
        %v948 = vrcp.pop %v947
        %v949 = vmul.f32 %v944, %v948
        %v951 = vsel %vm938, %v949, 0
        %953 = vmatprep.subr.mxu0 0.0
        %954 = vmatpush1.msra.mxu0 %v574
        %955 = vmatprep.subr.mxu0 0.0
        %956 = vmatpush1.msra.mxu0 0.0
        %957 = vmatprep.subr.mxu0 0.0
        %958 = vmatpush1.msra.mxu0 0.0
        %959 = vmatprep.subr.mxu0 0.0
        %960 = vmatpush1.msra.mxu0 0.0
        %961 = vmatprep.subr.mxu0 0.0
        %962 = vmatpush1.msra.mxu0 0.0
        %963 = vmatprep.subr.mxu0 0.0
        %964 = vmatpush1.msra.mxu0 0.0
        %965 = vmatprep.subr.mxu0 0.0
        %966 = vmatpush1.msra.mxu0 0.0
        %967 = vmatprep.subr.mxu0 0.0
        %968 = vmatpush1.msra.mxu0 0.0
        %969 = vmatprep.subr.mxu0 0.0
        %970 = vmatpush1.msra.mxu0 0.0
        %971 = vmatprep.subr.mxu0 0.0
        %972 = vmatpush1.msra.mxu0 0.0
        %973 = vmatprep.subr.mxu0 0.0
        %974 = vmatpush1.msra.mxu0 0.0
        %975 = vmatprep.subr.mxu0 0.0
        %976 = vmatpush1.msra.mxu0 0.0
        %977 = vmatprep.subr.mxu0 0.0
        %978 = vmatpush1.msra.mxu0 0.0
        %979 = vmatprep.subr.mxu0 0.0
        %980 = vmatpush1.msra.mxu0 0.0
        %981 = vmatprep.subr.mxu0 0.0
        %982 = vmatpush1.msra.mxu0 0.0
        %983 = vmatprep.subr.mxu0 0.0
        %984 = vmatpush1.msra.mxu0 0.0
        %985 = vmatprep.subr.mxu0 0.0
        %986 = vmatpush1.msra.mxu0 0.0
        %987 = vmatprep.subr.mxu0 0.0
        %988 = vmatpush1.msra.mxu0 0.0
        %989 = vmatprep.subr.mxu0 0.0
        %990 = vmatpush1.msra.mxu0 0.0
        %991 = vmatprep.subr.mxu0 0.0
        %992 = vmatpush1.msra.mxu0 0.0
        %993 = vmatprep.subr.mxu0 0.0
        %994 = vmatpush1.msra.mxu0 0.0
        %995 = vmatprep.subr.mxu0 0.0
        %996 = vmatpush1.msra.mxu0 0.0
        %997 = vmatprep.subr.mxu0 0.0
        %998 = vmatpush1.msra.mxu0 0.0
        %999 = vmatprep.subr.mxu0 0.0
        %1000 = vmatpush1.msra.mxu0 0.0
        %1001 = vmatprep.subr.mxu0 0.0
        %1002 = vmatpush1.msra.mxu0 0.0
        %1003 = vmatprep.subr.mxu0 0.0
        %1004 = vmatpush1.msra.mxu0 0.0
        %1005 = vmatprep.subr.mxu0 0.0
        %1006 = vmatpush1.msra.mxu0 0.0
        %1007 = vmatprep.subr.mxu0 0.0
        %1008 = vmatpush1.msra.mxu0 0.0
        %1009 = vmatprep.subr.mxu0 0.0
        %1010 = vmatpush1.msra.mxu0 0.0
        %1011 = vmatprep.subr.mxu0 0.0
        %1012 = vmatpush1.msra.mxu0 0.0
        %1013 = vmatprep.subr.mxu0 0.0
        %1014 = vmatpush1.msra.mxu0 0.0
        %1015 = vmatprep.subr.mxu0 0.0
        %1016 = vmatpush1.msra.mxu0 0.0
        %1017 = vmatprep.mubr.f32.mxu0 0.0
        %1018 = vmatmul.mubr.f32.gmra.mrb[0].mxu0 %v951
        %v1019 = vpop.f32.mrb[0].mxu0
        %v1020 = vadd.f32 0.0, %v1019
        %v1021 = vpop.f32.mrb[0].mxu0
        %1022 = vdwg.mxu0
        %v1023 = vld [vmem:[#allocation7] sm:$0xff]
        %v1024 = vld [vmem:[#allocation7 + $0x8] sm:$0xff]
        %v1025 = vld [vmem:[#allocation7 + $0x10] sm:$0xff]
        %v1026 = vld [vmem:[#allocation7 + $0x18] sm:$0xff]
        %v1027 = vld [vmem:[#allocation7 + $0x20] sm:$0xff]
        %v1028 = vld [vmem:[#allocation7 + $0x28] sm:$0xff]
        %v1029 = vld [vmem:[#allocation7 + $0x30] sm:$0xff]
        %v1030 = vld [vmem:[#allocation7 + $0x38] sm:$0xff]
        %v1031 = vld [vmem:[#allocation7 + $0x40] sm:$0xff]
        %v1032 = vld [vmem:[#allocation7 + $0x48] sm:$0xff]
        %v1033 = vld [vmem:[#allocation7 + $0x50] sm:$0xff]
        %v1034 = vld [vmem:[#allocation7 + $0x58] sm:$0xff]
        %v1035 = vld [vmem:[#allocation7 + $0x60] sm:$0xff]
        %v1036 = vld [vmem:[#allocation7 + $0x68] sm:$0xff]
        %v1037 = vld [vmem:[#allocation7 + $0x70] sm:$0xff]
        %v1038 = vld [vmem:[#allocation7 + $0x78] sm:$0xff]
        %1039 = vmatprep.subr.mxu0 0.0
        %1040 = vmatpush1.xpose.msra.mxu0 %v645
        %1041 = vmatprep.subr.mxu0 0.0
        %1042 = vmatpush1.xpose.msra.mxu0 0.0
        %1043 = vmatprep.subr.mxu0 0.0
        %1044 = vmatpush1.xpose.msra.mxu0 0.0
        %1045 = vmatprep.subr.mxu0 0.0
        %1046 = vmatpush1.xpose.msra.mxu0 0.0
        %1047 = vmatprep.subr.mxu0 0.0
        %1048 = vmatpush1.xpose.msra.mxu0 0.0
        %1049 = vmatprep.subr.mxu0 0.0
        %1050 = vmatpush1.xpose.msra.mxu0 0.0
        %1051 = vmatprep.subr.mxu0 0.0
        %1052 = vmatpush1.xpose.msra.mxu0 0.0
        %1053 = vmatprep.subr.mxu0 0.0
        %1054 = vmatpush1.xpose.msra.mxu0 0.0
        %1055 = vmatprep.subr.mxu0 0.0
        %1056 = vmatpush1.xpose.msra.mxu0 0.0
        %1057 = vmatprep.subr.mxu0 0.0
        %1058 = vmatpush1.xpose.msra.mxu0 0.0
        %1059 = vmatprep.subr.mxu0 0.0
        %1060 = vmatpush1.xpose.msra.mxu0 0.0
        %1061 = vmatprep.subr.mxu0 0.0
        %1062 = vmatpush1.xpose.msra.mxu0 0.0
        %1063 = vmatprep.subr.mxu0 0.0
        %1064 = vmatpush1.xpose.msra.mxu0 0.0
        %1065 = vmatprep.subr.mxu0 0.0
        %1066 = vmatpush1.xpose.msra.mxu0 0.0
        %1067 = vmatprep.subr.mxu0 0.0
        %1068 = vmatpush1.xpose.msra.mxu0 0.0
        %1069 = vmatprep.subr.mxu0 0.0
        %1070 = vmatpush1.xpose.msra.mxu0 0.0
        %1071 = vmatprep.subr.mxu0 0.0
        %1072 = vmatpush1.xpose.msra.mxu0 0.0
        %1073 = vmatprep.subr.mxu0 0.0
        %1074 = vmatpush1.xpose.msra.mxu0 0.0
        %1075 = vmatprep.subr.mxu0 0.0
        %1076 = vmatpush1.xpose.msra.mxu0 0.0
        %1077 = vmatprep.subr.mxu0 0.0
        %1078 = vmatpush1.xpose.msra.mxu0 0.0
        %1079 = vmatprep.subr.mxu0 0.0
        %1080 = vmatpush1.xpose.msra.mxu0 0.0
        %1081 = vmatprep.subr.mxu0 0.0
        %1082 = vmatpush1.xpose.msra.mxu0 0.0
        %1083 = vmatprep.subr.mxu0 0.0
        %1084 = vmatpush1.xpose.msra.mxu0 0.0
        %1085 = vmatprep.subr.mxu0 0.0
        %1086 = vmatpush1.xpose.msra.mxu0 0.0
        %1087 = vmatprep.subr.mxu0 0.0
        %1088 = vmatpush1.xpose.msra.mxu0 0.0
        %1089 = vmatprep.subr.mxu0 0.0
        %1090 = vmatpush1.xpose.msra.mxu0 0.0
        %1091 = vmatprep.subr.mxu0 0.0
        %1092 = vmatpush1.xpose.msra.mxu0 0.0
        %1093 = vmatprep.subr.mxu0 0.0
        %1094 = vmatpush1.xpose.msra.mxu0 0.0
        %1095 = vmatprep.subr.mxu0 0.0
        %1096 = vmatpush1.xpose.msra.mxu0 0.0
        %1097 = vmatprep.subr.mxu0 0.0
        %1098 = vmatpush1.xpose.msra.mxu0 0.0
        %1099 = vmatprep.subr.mxu0 0.0
        %1100 = vmatpush1.xpose.msra.mxu0 0.0
        %1101 = vmatprep.subr.mxu0 0.0
        %1102 = vmatpush1.xpose.msra.mxu0 0.0
        %1103 = vmatprep.mubr.f32.mxu0 0.0
        %1104 = vmatmul.mubr.f32.gmra.mrb[0].mxu0 %v576
        %v1105 = vpop.f32.mrb[0].mxu0
        %v1106 = vadd.f32 0.0, %v1105
        %v1107 = vpop.f32.mrb[0].mxu0
        %1108 = vdwg.mxu0
        %v1109 = vsel %vm866, %v1106, -1e+30
        %v1110 = vsel %vm938, %v1109, -inf
        %1111 = vmax.xlane.f32.xlu0 %v1110
        %v1112 = vpop.xlane.xlu0 %1111
        %v1113 = vsub.f32 %v1109, %v1112
        %v1114 = vmul.f32 %v1113, 1.442695
        %v1115 = vpow.pop %v1114
        %v1116 = vsel %vm938, %v1115, 0.0
        %1117 = vadd.xlane.f32.xlu0 %v1116
        %v1118 = vpop.xlane.xlu0 %1117
        %v1119 = vrcp.pop %v1118
        %v1120 = vmul.f32 %v1115, %v1119
        %v1122 = vsel %vm938, %v1120, 0
        %1124 = vmatprep.subr.mxu0 0.0
        %1125 = vmatpush1.msra.mxu0 %v647
        %1126 = vmatprep.subr.mxu0 0.0
        %1127 = vmatpush1.msra.mxu0 0.0
        %1128 = vmatprep.subr.mxu0 0.0
        %1129 = vmatpush1.msra.mxu0 0.0
        %1130 = vmatprep.subr.mxu0 0.0
        %1131 = vmatpush1.msra.mxu0 0.0
        %1132 = vmatprep.subr.mxu0 0.0
        %1133 = vmatpush1.msra.mxu0 0.0
        %1134 = vmatprep.subr.mxu0 0.0
        %1135 = vmatpush1.msra.mxu0 0.0
        %1136 = vmatprep.subr.mxu0 0.0
        %1137 = vmatpush1.msra.mxu0 0.0
        %1138 = vmatprep.subr.mxu0 0.0
        %1139 = vmatpush1.msra.mxu0 0.0
        %1140 = vmatprep.subr.mxu0 0.0
        %1141 = vmatpush1.msra.mxu0 0.0
        %1142 = vmatprep.subr.mxu0 0.0
        %1143 = vmatpush1.msra.mxu0 0.0
        %1144 = vmatprep.subr.mxu0 0.0
        %1145 = vmatpush1.msra.mxu0 0.0
        %1146 = vmatprep.subr.mxu0 0.0
        %1147 = vmatpush1.msra.mxu0 0.0
        %1148 = vmatprep.subr.mxu0 0.0
        %1149 = vmatpush1.msra.mxu0 0.0
        %1150 = vmatprep.subr.mxu0 0.0
        %1151 = vmatpush1.msra.mxu0 0.0
        %1152 = vmatprep.subr.mxu0 0.0
        %1153 = vmatpush1.msra.mxu0 0.0
        %1154 = vmatprep.subr.mxu0 0.0
        %1155 = vmatpush1.msra.mxu0 0.0
        %1156 = vmatprep.subr.mxu0 0.0
        %1157 = vmatpush1.msra.mxu0 0.0
        %1158 = vmatprep.subr.mxu0 0.0
        %1159 = vmatpush1.msra.mxu0 0.0
        %1160 = vmatprep.subr.mxu0 0.0
        %1161 = vmatpush1.msra.mxu0 0.0
        %1162 = vmatprep.subr.mxu0 0.0
        %1163 = vmatpush1.msra.mxu0 0.0
        %1164 = vmatprep.subr.mxu0 0.0
        %1165 = vmatpush1.msra.mxu0 0.0
        %1166 = vmatprep.subr.mxu0 0.0
        %1167 = vmatpush1.msra.mxu0 0.0
        %1168 = vmatprep.subr.mxu0 0.0
        %1169 = vmatpush1.msra.mxu0 0.0
        %1170 = vmatprep.subr.mxu0 0.0
        %1171 = vmatpush1.msra.mxu0 0.0
        %1172 = vmatprep.subr.mxu0 0.0
        %1173 = vmatpush1.msra.mxu0 0.0
        %1174 = vmatprep.subr.mxu0 0.0
        %1175 = vmatpush1.msra.mxu0 0.0
        %1176 = vmatprep.subr.mxu0 0.0
        %1177 = vmatpush1.msra.mxu0 0.0
        %1178 = vmatprep.subr.mxu0 0.0
        %1179 = vmatpush1.msra.mxu0 0.0
        %1180 = vmatprep.subr.mxu0 0.0
        %1181 = vmatpush1.msra.mxu0 0.0
        %1182 = vmatprep.subr.mxu0 0.0
        %1183 = vmatpush1.msra.mxu0 0.0
        %1184 = vmatprep.subr.mxu0 0.0
        %1185 = vmatpush1.msra.mxu0 0.0
        %1186 = vmatprep.subr.mxu0 0.0
        %1187 = vmatpush1.msra.mxu0 0.0
        %1188 = vmatprep.mubr.f32.mxu0 0.0
        %1189 = vmatmul.mubr.f32.gmra.mrb[0].mxu0 %v1122
        %v1190 = vpop.f32.mrb[0].mxu0
        %v1191 = vadd.f32 0.0, %v1190
        %v1192 = vpop.f32.mrb[0].mxu0
        %1193 = vdwg.mxu0
        %v1194 = vld [vmem:[#allocation7 + $0x80] sm:$0xff]
        %v1195 = vld [vmem:[#allocation7 + $0x88] sm:$0xff]
        %v1196 = vld [vmem:[#allocation7 + $0x90] sm:$0xff]
        %v1197 = vld [vmem:[#allocation7 + $0x98] sm:$0xff]
        %v1198 = vld [vmem:[#allocation7 + $0xa0] sm:$0xff]
        %v1199 = vld [vmem:[#allocation7 + $0xa8] sm:$0xff]
        %v1200 = vld [vmem:[#allocation7 + $0xb0] sm:$0xff]
        %v1201 = vld [vmem:[#allocation7 + $0xb8] sm:$0xff]
        %v1202 = vld [vmem:[#allocation7 + $0xc0] sm:$0xff]
        %v1203 = vld [vmem:[#allocation7 + $0xc8] sm:$0xff]
        %v1204 = vld [vmem:[#allocation7 + $0xd0] sm:$0xff]
        %v1205 = vld [vmem:[#allocation7 + $0xd8] sm:$0xff]
        %v1206 = vld [vmem:[#allocation7 + $0xe0] sm:$0xff]
        %v1207 = vld [vmem:[#allocation7 + $0xe8] sm:$0xff]
        %v1208 = vld [vmem:[#allocation7 + $0xf0] sm:$0xff]
        %v1209 = vld [vmem:[#allocation7 + $0xf8] sm:$0xff]
        %1210 = vmatprep.subr.mxu0 0.0
        %1211 = vmatpush1.msra.mxu0 %v1194
        %1212 = vmatprep.subr.mxu0 0.0
        %1213 = vmatpush1.msra.mxu0 %v1195
        %1214 = vmatprep.subr.mxu0 0.0
        %1215 = vmatpush1.msra.mxu0 %v1196
        %1216 = vmatprep.subr.mxu0 0.0
        %1217 = vmatpush1.msra.mxu0 %v1197
        %1218 = vmatprep.subr.mxu0 0.0
        %1219 = vmatpush1.msra.mxu0 %v1198
        %1220 = vmatprep.subr.mxu0 0.0
        %1221 = vmatpush1.msra.mxu0 %v1199
        %1222 = vmatprep.subr.mxu0 0.0
        %1223 = vmatpush1.msra.mxu0 %v1200
        %1224 = vmatprep.subr.mxu0 0.0
        %1225 = vmatpush1.msra.mxu0 %v1201
        %1226 = vmatprep.subr.mxu0 0.0
        %1227 = vmatpush1.msra.mxu0 %v1202
        %1228 = vmatprep.subr.mxu0 0.0
        %1229 = vmatpush1.msra.mxu0 %v1203
        %1230 = vmatprep.subr.mxu0 0.0
        %1231 = vmatpush1.msra.mxu0 %v1204
        %1232 = vmatprep.subr.mxu0 0.0
        %1233 = vmatpush1.msra.mxu0 %v1205
        %1234 = vmatprep.subr.mxu0 0.0
        %1235 = vmatpush1.msra.mxu0 %v1206
        %1236 = vmatprep.subr.mxu0 0.0
        %1237 = vmatpush1.msra.mxu0 %v1207
        %1238 = vmatprep.subr.mxu0 0.0
        %1239 = vmatpush1.msra.mxu0 %v1208
        %1240 = vmatprep.subr.mxu0 0.0
        %1241 = vmatpush1.msra.mxu0 %v1209
        %1242 = vmatprep.subr.mxu0 0.0
        %1243 = vmatpush1.msra.mxu0 0.0
        %1244 = vmatprep.subr.mxu0 0.0
        %1245 = vmatpush1.msra.mxu0 0.0
        %1246 = vmatprep.subr.mxu0 0.0
        %1247 = vmatpush1.msra.mxu0 0.0
        %1248 = vmatprep.subr.mxu0 0.0
        %1249 = vmatpush1.msra.mxu0 0.0
        %1250 = vmatprep.subr.mxu0 0.0
        %1251 = vmatpush1.msra.mxu0 0.0
        %1252 = vmatprep.subr.mxu0 0.0
        %1253 = vmatpush1.msra.mxu0 0.0
        %1254 = vmatprep.subr.mxu0 0.0
        %1255 = vmatpush1.msra.mxu0 0.0
        %1256 = vmatprep.subr.mxu0 0.0
        %1257 = vmatpush1.msra.mxu0 0.0
        %1258 = vmatprep.subr.mxu0 0.0
        %1259 = vmatpush1.msra.mxu0 0.0
        %1260 = vmatprep.subr.mxu0 0.0
        %1261 = vmatpush1.msra.mxu0 0.0
        %1262 = vmatprep.subr.mxu0 0.0
        %1263 = vmatpush1.msra.mxu0 0.0
        %1264 = vmatprep.subr.mxu0 0.0
        %1265 = vmatpush1.msra.mxu0 0.0
        %1266 = vmatprep.subr.mxu0 0.0
        %1267 = vmatpush1.msra.mxu0 0.0
        %1268 = vmatprep.subr.mxu0 0.0
        %1269 = vmatpush1.msra.mxu0 0.0
        %1270 = vmatprep.subr.mxu0 0.0
        %1271 = vmatpush1.msra.mxu0 0.0
        %1272 = vmatprep.subr.mxu0 0.0
        %1273 = vmatpush1.msra.mxu0 0.0
        %1274 = vmatprep.mubr.f32.mxu0 0.0
        %1275 = vmatmul.mubr.f32.gmra.mrb[0].mxu0 %v1191
        %v1276 = vpop.f32.mrb[0].mxu0
        %v1277 = vadd.f32 0.0, %v1276
        %v1278 = vpop.f32.mrb[0].mxu0
        %1279 = vdwg.mxu0
        %1280 = vmatprep.subr.mxu0 0.0
        %1281 = vmatpush1.msra.mxu0 %v1023
        %1282 = vmatprep.subr.mxu0 0.0
        %1283 = vmatpush1.msra.mxu0 %v1024
        %1284 = vmatprep.subr.mxu0 0.0
        %1285 = vmatpush1.msra.mxu0 %v1025
        %1286 = vmatprep.subr.mxu0 0.0
        %1287 = vmatpush1.msra.mxu0 %v1026
        %1288 = vmatprep.subr.mxu0 0.0
        %1289 = vmatpush1.msra.mxu0 %v1027
        %1290 = vmatprep.subr.mxu0 0.0
        %1291 = vmatpush1.msra.mxu0 %v1028
        %1292 = vmatprep.subr.mxu0 0.0
        %1293 = vmatpush1.msra.mxu0 %v1029
        %1294 = vmatprep.subr.mxu0 0.0
        %1295 = vmatpush1.msra.mxu0 %v1030
        %1296 = vmatprep.subr.mxu0 0.0
        %1297 = vmatpush1.msra.mxu0 %v1031
        %1298 = vmatprep.subr.mxu0 0.0
        %1299 = vmatpush1.msra.mxu0 %v1032
        %1300 = vmatprep.subr.mxu0 0.0
        %1301 = vmatpush1.msra.mxu0 %v1033
        %1302 = vmatprep.subr.mxu0 0.0
        %1303 = vmatpush1.msra.mxu0 %v1034
        %1304 = vmatprep.subr.mxu0 0.0
        %1305 = vmatpush1.msra.mxu0 %v1035
        %1306 = vmatprep.subr.mxu0 0.0
        %1307 = vmatpush1.msra.mxu0 %v1036
        %1308 = vmatprep.subr.mxu0 0.0
        %1309 = vmatpush1.msra.mxu0 %v1037
        %1310 = vmatprep.subr.mxu0 0.0
        %1311 = vmatpush1.msra.mxu0 %v1038
        %1312 = vmatprep.subr.mxu0 0.0
        %1313 = vmatpush1.msra.mxu0 0.0
        %1314 = vmatprep.subr.mxu0 0.0
        %1315 = vmatpush1.msra.mxu0 0.0
        %1316 = vmatprep.subr.mxu0 0.0
        %1317 = vmatpush1.msra.mxu0 0.0
        %1318 = vmatprep.subr.mxu0 0.0
        %1319 = vmatpush1.msra.mxu0 0.0
        %1320 = vmatprep.subr.mxu0 0.0
        %1321 = vmatpush1.msra.mxu0 0.0
        %1322 = vmatprep.subr.mxu0 0.0
        %1323 = vmatpush1.msra.mxu0 0.0
        %1324 = vmatprep.subr.mxu0 0.0
        %1325 = vmatpush1.msra.mxu0 0.0
        %1326 = vmatprep.subr.mxu0 0.0
        %1327 = vmatpush1.msra.mxu0 0.0
        %1328 = vmatprep.subr.mxu0 0.0
        %1329 = vmatpush1.msra.mxu0 0.0
        %1330 = vmatprep.subr.mxu0 0.0
        %1331 = vmatpush1.msra.mxu0 0.0
        %1332 = vmatprep.subr.mxu0 0.0
        %1333 = vmatpush1.msra.mxu0 0.0
        %1334 = vmatprep.subr.mxu0 0.0
        %1335 = vmatpush1.msra.mxu0 0.0
        %1336 = vmatprep.subr.mxu0 0.0
        %1337 = vmatpush1.msra.mxu0 0.0
        %1338 = vmatprep.subr.mxu0 0.0
        %1339 = vmatpush1.msra.mxu0 0.0
        %1340 = vmatprep.subr.mxu0 0.0
        %1341 = vmatpush1.msra.mxu0 0.0
        %1342 = vmatprep.subr.mxu0 0.0
        %1343 = vmatpush1.msra.mxu0 0.0
        %1344 = vmatprep.mubr.f32.mxu0 0.0
        %1345 = vmatmul.mubr.f32.gmra.mrb[0].mxu0 %v1020
        %v1346 = vpop.f32.mrb[0].mxu0
        %v1347 = vadd.f32 %v1277, %v1346
        %v1348 = vpop.f32.mrb[0].mxu0
        %1349 = vdwg.mxu0
        %1350 = vmatprep.subr.mxu0 0.0
        %1351 = vmatpush1.xpose.msra.mxu0 %v718
        %1352 = vmatprep.subr.mxu0 0.0
        %1353 = vmatpush1.xpose.msra.mxu0 0.0
        %1354 = vmatprep.subr.mxu0 0.0
        %1355 = vmatpush1.xpose.msra.mxu0 0.0
        %1356 = vmatprep.subr.mxu0 0.0
        %1357 = vmatpush1.xpose.msra.mxu0 0.0
        %1358 = vmatprep.subr.mxu0 0.0
        %1359 = vmatpush1.xpose.msra.mxu0 0.0
        %1360 = vmatprep.subr.mxu0 0.0
        %1361 = vmatpush1.xpose.msra.mxu0 0.0
        %1362 = vmatprep.subr.mxu0 0.0
        %1363 = vmatpush1.xpose.msra.mxu0 0.0
        %1364 = vmatprep.subr.mxu0 0.0
        %1365 = vmatpush1.xpose.msra.mxu0 0.0
        %1366 = vmatprep.subr.mxu0 0.0
        %1367 = vmatpush1.xpose.msra.mxu0 0.0
        %1368 = vmatprep.subr.mxu0 0.0
        %1369 = vmatpush1.xpose.msra.mxu0 0.0
        %1370 = vmatprep.subr.mxu0 0.0
        %1371 = vmatpush1.xpose.msra.mxu0 0.0
        %1372 = vmatprep.subr.mxu0 0.0
        %1373 = vmatpush1.xpose.msra.mxu0 0.0
        %1374 = vmatprep.subr.mxu0 0.0
        %1375 = vmatpush1.xpose.msra.mxu0 0.0
        %1376 = vmatprep.subr.mxu0 0.0
        %1377 = vmatpush1.xpose.msra.mxu0 0.0
        %1378 = vmatprep.subr.mxu0 0.0
        %1379 = vmatpush1.xpose.msra.mxu0 0.0
        %1380 = vmatprep.subr.mxu0 0.0
        %1381 = vmatpush1.xpose.msra.mxu0 0.0
        %1382 = vmatprep.subr.mxu0 0.0
        %1383 = vmatpush1.xpose.msra.mxu0 0.0
        %1384 = vmatprep.subr.mxu0 0.0
        %1385 = vmatpush1.xpose.msra.mxu0 0.0
        %1386 = vmatprep.subr.mxu0 0.0
        %1387 = vmatpush1.xpose.msra.mxu0 0.0
        %1388 = vmatprep.subr.mxu0 0.0
        %1389 = vmatpush1.xpose.msra.mxu0 0.0
        %1390 = vmatprep.subr.mxu0 0.0
        %1391 = vmatpush1.xpose.msra.mxu0 0.0
        %1392 = vmatprep.subr.mxu0 0.0
        %1393 = vmatpush1.xpose.msra.mxu0 0.0
        %1394 = vmatprep.subr.mxu0 0.0
        %1395 = vmatpush1.xpose.msra.mxu0 0.0
        %1396 = vmatprep.subr.mxu0 0.0
        %1397 = vmatpush1.xpose.msra.mxu0 0.0
        %1398 = vmatprep.subr.mxu0 0.0
        %1399 = vmatpush1.xpose.msra.mxu0 0.0
        %1400 = vmatprep.subr.mxu0 0.0
        %1401 = vmatpush1.xpose.msra.mxu0 0.0
        %1402 = vmatprep.subr.mxu0 0.0
        %1403 = vmatpush1.xpose.msra.mxu0 0.0
        %1404 = vmatprep.subr.mxu0 0.0
        %1405 = vmatpush1.xpose.msra.mxu0 0.0
        %1406 = vmatprep.subr.mxu0 0.0
        %1407 = vmatpush1.xpose.msra.mxu0 0.0
        %1408 = vmatprep.subr.mxu0 0.0
        %1409 = vmatpush1.xpose.msra.mxu0 0.0
        %1410 = vmatprep.subr.mxu0 0.0
        %1411 = vmatpush1.xpose.msra.mxu0 0.0
        %1412 = vmatprep.subr.mxu0 0.0
        %1413 = vmatpush1.xpose.msra.mxu0 0.0
        %1414 = vmatprep.mubr.f32.mxu0 0.0
        %1415 = vmatmul.mubr.f32.gmra.mrb[0].mxu0 %v716
        %v1416 = vpop.f32.mrb[0].mxu0
        %v1417 = vadd.f32 0.0, %v1416
        %v1418 = vpop.f32.mrb[0].mxu0
        %1419 = vdwg.mxu0
        %v1420 = vsel %vm866, %v1417, -1e+30
        %v1421 = vsel %vm938, %v1420, -inf
        %1422 = vmax.xlane.f32.xlu0 %v1421
        %v1423 = vpop.xlane.xlu0 %1422
        %v1424 = vsub.f32 %v1420, %v1423
        %v1425 = vmul.f32 %v1424, 1.442695
        %v1426 = vpow.pop %v1425
        %v1427 = vsel %vm938, %v1426, 0.0
        %1428 = vadd.xlane.f32.xlu0 %v1427
        %v1429 = vpop.xlane.xlu0 %1428
        %v1430 = vrcp.pop %v1429
        %v1431 = vmul.f32 %v1426, %v1430
        %v1433 = vsel %vm938, %v1431, 0
        %1435 = vmatprep.subr.mxu0 0.0
        %1436 = vmatpush1.msra.mxu0 %v787
        %1437 = vmatprep.subr.mxu0 0.0
        %1438 = vmatpush1.msra.mxu0 0.0
        %1439 = vmatprep.subr.mxu0 0.0
        %1440 = vmatpush1.msra.mxu0 0.0
        %1441 = vmatprep.subr.mxu0 0.0
        %1442 = vmatpush1.msra.mxu0 0.0
        %1443 = vmatprep.subr.mxu0 0.0
        %1444 = vmatpush1.msra.mxu0 0.0
        %1445 = vmatprep.subr.mxu0 0.0
        %1446 = vmatpush1.msra.mxu0 0.0
        %1447 = vmatprep.subr.mxu0 0.0
        %1448 = vmatpush1.msra.mxu0 0.0
        %1449 = vmatprep.subr.mxu0 0.0
        %1450 = vmatpush1.msra.mxu0 0.0
        %1451 = vmatprep.subr.mxu0 0.0
        %1452 = vmatpush1.msra.mxu0 0.0
        %1453 = vmatprep.subr.mxu0 0.0
        %1454 = vmatpush1.msra.mxu0 0.0
        %1455 = vmatprep.subr.mxu0 0.0
        %1456 = vmatpush1.msra.mxu0 0.0
        %1457 = vmatprep.subr.mxu0 0.0
        %1458 = vmatpush1.msra.mxu0 0.0
        %1459 = vmatprep.subr.mxu0 0.0
        %1460 = vmatpush1.msra.mxu0 0.0
        %1461 = vmatprep.subr.mxu0 0.0
        %1462 = vmatpush1.msra.mxu0 0.0
        %1463 = vmatprep.subr.mxu0 0.0
        %1464 = vmatpush1.msra.mxu0 0.0
        %1465 = vmatprep.subr.mxu0 0.0
        %1466 = vmatpush1.msra.mxu0 0.0
        %1467 = vmatprep.subr.mxu0 0.0
        %1468 = vmatpush1.msra.mxu0 0.0
        %1469 = vmatprep.subr.mxu0 0.0
        %1470 = vmatpush1.msra.mxu0 0.0
        %1471 = vmatprep.subr.mxu0 0.0
        %1472 = vmatpush1.msra.mxu0 0.0
        %1473 = vmatprep.subr.mxu0 0.0
        %1474 = vmatpush1.msra.mxu0 0.0
        %1475 = vmatprep.subr.mxu0 0.0
        %1476 = vmatpush1.msra.mxu0 0.0
        %1477 = vmatprep.subr.mxu0 0.0
        %1478 = vmatpush1.msra.mxu0 0.0
        %1479 = vmatprep.subr.mxu0 0.0
        %1480 = vmatpush1.msra.mxu0 0.0
        %1481 = vmatprep.subr.mxu0 0.0
        %1482 = vmatpush1.msra.mxu0 0.0
        %1483 = vmatprep.subr.mxu0 0.0
        %1484 = vmatpush1.msra.mxu0 0.0
        %1485 = vmatprep.subr.mxu0 0.0
        %1486 = vmatpush1.msra.mxu0 0.0
        %1487 = vmatprep.subr.mxu0 0.0
        %1488 = vmatpush1.msra.mxu0 0.0
        %1489 = vmatprep.subr.mxu0 0.0
        %1490 = vmatpush1.msra.mxu0 0.0
        %1491 = vmatprep.subr.mxu0 0.0
        %1492 = vmatpush1.msra.mxu0 0.0
        %1493 = vmatprep.subr.mxu0 0.0
        %1494 = vmatpush1.msra.mxu0 0.0
        %1495 = vmatprep.subr.mxu0 0.0
        %1496 = vmatpush1.msra.mxu0 0.0
        %1497 = vmatprep.subr.mxu0 0.0
        %1498 = vmatpush1.msra.mxu0 0.0
        %1499 = vmatprep.mubr.f32.mxu0 0.0
        %1500 = vmatmul.mubr.f32.gmra.mrb[0].mxu0 %v1433
        %v1501 = vpop.f32.mrb[0].mxu0
        %v1502 = vadd.f32 0.0, %v1501
        %v1503 = vpop.f32.mrb[0].mxu0
        %1504 = vdwg.mxu0
        %v1505 = vld [vmem:[#allocation7 + $0x100] sm:$0xff]
        %v1506 = vld [vmem:[#allocation7 + $0x108] sm:$0xff]
        %v1507 = vld [vmem:[#allocation7 + $0x110] sm:$0xff]
        %v1508 = vld [vmem:[#allocation7 + $0x118] sm:$0xff]
        %v1509 = vld [vmem:[#allocation7 + $0x120] sm:$0xff]
        %v1510 = vld [vmem:[#allocation7 + $0x128] sm:$0xff]
        %v1511 = vld [vmem:[#allocation7 + $0x130] sm:$0xff]
        %v1512 = vld [vmem:[#allocation7 + $0x138] sm:$0xff]
        %v1513 = vld [vmem:[#allocation7 + $0x140] sm:$0xff]
        %v1514 = vld [vmem:[#allocation7 + $0x148] sm:$0xff]
        %v1515 = vld [vmem:[#allocation7 + $0x150] sm:$0xff]
        %v1516 = vld [vmem:[#allocation7 + $0x158] sm:$0xff]
        %v1517 = vld [vmem:[#allocation7 + $0x160] sm:$0xff]
        %v1518 = vld [vmem:[#allocation7 + $0x168] sm:$0xff]
        %v1519 = vld [vmem:[#allocation7 + $0x170] sm:$0xff]
        %v1520 = vld [vmem:[#allocation7 + $0x178] sm:$0xff]
        %1521 = vmatprep.subr.mxu0 0.0
        %1522 = vmatpush1.msra.mxu0 %v1505
        %1523 = vmatprep.subr.mxu0 0.0
        %1524 = vmatpush1.msra.mxu0 %v1506
        %1525 = vmatprep.subr.mxu0 0.0
        %1526 = vmatpush1.msra.mxu0 %v1507
        %1527 = vmatprep.subr.mxu0 0.0
        %1528 = vmatpush1.msra.mxu0 %v1508
        %1529 = vmatprep.subr.mxu0 0.0
        %1530 = vmatpush1.msra.mxu0 %v1509
        %1531 = vmatprep.subr.mxu0 0.0
        %1532 = vmatpush1.msra.mxu0 %v1510
        %1533 = vmatprep.subr.mxu0 0.0
        %1534 = vmatpush1.msra.mxu0 %v1511
        %1535 = vmatprep.subr.mxu0 0.0
        %1536 = vmatpush1.msra.mxu0 %v1512
        %1537 = vmatprep.subr.mxu0 0.0
        %1538 = vmatpush1.msra.mxu0 %v1513
        %1539 = vmatprep.subr.mxu0 0.0
        %1540 = vmatpush1.msra.mxu0 %v1514
        %1541 = vmatprep.subr.mxu0 0.0
        %1542 = vmatpush1.msra.mxu0 %v1515
        %1543 = vmatprep.subr.mxu0 0.0
        %1544 = vmatpush1.msra.mxu0 %v1516
        %1545 = vmatprep.subr.mxu0 0.0
        %1546 = vmatpush1.msra.mxu0 %v1517
        %1547 = vmatprep.subr.mxu0 0.0
        %1548 = vmatpush1.msra.mxu0 %v1518
        %1549 = vmatprep.subr.mxu0 0.0
        %1550 = vmatpush1.msra.mxu0 %v1519
        %1551 = vmatprep.subr.mxu0 0.0
        %1552 = vmatpush1.msra.mxu0 %v1520
        %1553 = vmatprep.subr.mxu0 0.0
        %1554 = vmatpush1.msra.mxu0 0.0
        %1555 = vmatprep.subr.mxu0 0.0
        %1556 = vmatpush1.msra.mxu0 0.0
        %1557 = vmatprep.subr.mxu0 0.0
        %1558 = vmatpush1.msra.mxu0 0.0
        %1559 = vmatprep.subr.mxu0 0.0
        %1560 = vmatpush1.msra.mxu0 0.0
        %1561 = vmatprep.subr.mxu0 0.0
        %1562 = vmatpush1.msra.mxu0 0.0
        %1563 = vmatprep.subr.mxu0 0.0
        %1564 = vmatpush1.msra.mxu0 0.0
        %1565 = vmatprep.subr.mxu0 0.0
        %1566 = vmatpush1.msra.mxu0 0.0
        %1567 = vmatprep.subr.mxu0 0.0
        %1568 = vmatpush1.msra.mxu0 0.0
        %1569 = vmatprep.subr.mxu0 0.0
        %1570 = vmatpush1.msra.mxu0 0.0
        %1571 = vmatprep.subr.mxu0 0.0
        %1572 = vmatpush1.msra.mxu0 0.0
        %1573 = vmatprep.subr.mxu0 0.0
        %1574 = vmatpush1.msra.mxu0 0.0
        %1575 = vmatprep.subr.mxu0 0.0
        %1576 = vmatpush1.msra.mxu0 0.0
        %1577 = vmatprep.subr.mxu0 0.0
        %1578 = vmatpush1.msra.mxu0 0.0
        %1579 = vmatprep.subr.mxu0 0.0
        %1580 = vmatpush1.msra.mxu0 0.0
        %1581 = vmatprep.subr.mxu0 0.0
        %1582 = vmatpush1.msra.mxu0 0.0
        %1583 = vmatprep.subr.mxu0 0.0
        %1584 = vmatpush1.msra.mxu0 0.0
        %1585 = vmatprep.mubr.f32.mxu0 0.0
        %1586 = vmatmul.mubr.f32.gmra.mrb[0].mxu0 %v1502
        %v1587 = vpop.f32.mrb[0].mxu0
        %v1588 = vadd.f32 0.0, %v1587
        %v1589 = vpop.f32.mrb[0].mxu0
        %1590 = vdwg.mxu0
        %v1591 = vadd.f32 %v1347, %v1588
        %1592 = vmatprep.subr.mxu0 0.0
        %1593 = vmatpush1.xpose.msra.mxu0 %v858
        %1594 = vmatprep.subr.mxu0 0.0
        %1595 = vmatpush1.xpose.msra.mxu0 0.0
        %1596 = vmatprep.subr.mxu0 0.0
        %1597 = vmatpush1.xpose.msra.mxu0 0.0
        %1598 = vmatprep.subr.mxu0 0.0
        %1599 = vmatpush1.xpose.msra.mxu0 0.0
        %1600 = vmatprep.subr.mxu0 0.0
        %1601 = vmatpush1.xpose.msra.mxu0 0.0
        %1602 = vmatprep.subr.mxu0 0.0
        %1603 = vmatpush1.xpose.msra.mxu0 0.0
        %1604 = vmatprep.subr.mxu0 0.0
        %1605 = vmatpush1.xpose.msra.mxu0 0.0
        %1606 = vmatprep.subr.mxu0 0.0
        %1607 = vmatpush1.xpose.msra.mxu0 0.0
        %1608 = vmatprep.subr.mxu0 0.0
        %1609 = vmatpush1.xpose.msra.mxu0 0.0
        %1610 = vmatprep.subr.mxu0 0.0
        %1611 = vmatpush1.xpose.msra.mxu0 0.0
        %1612 = vmatprep.subr.mxu0 0.0
        %1613 = vmatpush1.xpose.msra.mxu0 0.0
        %1614 = vmatprep.subr.mxu0 0.0
        %1615 = vmatpush1.xpose.msra.mxu0 0.0
        %1616 = vmatprep.subr.mxu0 0.0
        %1617 = vmatpush1.xpose.msra.mxu0 0.0
        %1618 = vmatprep.subr.mxu0 0.0
        %1619 = vmatpush1.xpose.msra.mxu0 0.0
        %1620 = vmatprep.subr.mxu0 0.0
        %1621 = vmatpush1.xpose.msra.mxu0 0.0
        %1622 = vmatprep.subr.mxu0 0.0
        %1623 = vmatpush1.xpose.msra.mxu0 0.0
        %1624 = vmatprep.subr.mxu0 0.0
        %1625 = vmatpush1.xpose.msra.mxu0 0.0
        %1626 = vmatprep.subr.mxu0 0.0
        %1627 = vmatpush1.xpose.msra.mxu0 0.0
        %1628 = vmatprep.subr.mxu0 0.0
        %1629 = vmatpush1.xpose.msra.mxu0 0.0
        %1630 = vmatprep.subr.mxu0 0.0
        %1631 = vmatpush1.xpose.msra.mxu0 0.0
        %1632 = vmatprep.subr.mxu0 0.0
        %1633 = vmatpush1.xpose.msra.mxu0 0.0
        %1634 = vmatprep.subr.mxu0 0.0
        %1635 = vmatpush1.xpose.msra.mxu0 0.0
        %1636 = vmatprep.subr.mxu0 0.0
        %1637 = vmatpush1.xpose.msra.mxu0 0.0
        %1638 = vmatprep.subr.mxu0 0.0
        %1639 = vmatpush1.xpose.msra.mxu0 0.0
        %1640 = vmatprep.subr.mxu0 0.0
        %1641 = vmatpush1.xpose.msra.mxu0 0.0
        %1642 = vmatprep.subr.mxu0 0.0
        %1643 = vmatpush1.xpose.msra.mxu0 0.0
        %1644 = vmatprep.subr.mxu0 0.0
        %1645 = vmatpush1.xpose.msra.mxu0 0.0
        %1646 = vmatprep.subr.mxu0 0.0
        %1647 = vmatpush1.xpose.msra.mxu0 0.0
        %1648 = vmatprep.subr.mxu0 0.0
        %1649 = vmatpush1.xpose.msra.mxu0 0.0
        %1650 = vmatprep.subr.mxu0 0.0
        %1651 = vmatpush1.xpose.msra.mxu0 0.0
        %1652 = vmatprep.subr.mxu0 0.0
        %1653 = vmatpush1.xpose.msra.mxu0 0.0
        %1654 = vmatprep.subr.mxu0 0.0
        %1655 = vmatpush1.xpose.msra.mxu0 0.0
        %1656 = vmatprep.mubr.f32.mxu0 0.0
        %1657 = vmatmul.mubr.f32.gmra.mrb[0].mxu0 %v789
        %v1658 = vpop.f32.mrb[0].mxu0
        %v1659 = vadd.f32 0.0, %v1658
        %v1660 = vpop.f32.mrb[0].mxu0
        %1661 = vdwg.mxu0
        %v1662 = vsel %vm866, %v1659, -1e+30
        %v1663 = vsel %vm938, %v1662, -inf
        %1664 = vmax.xlane.f32.xlu0 %v1663
        %v1665 = vpop.xlane.xlu0 %1664
        %v1666 = vsub.f32 %v1662, %v1665
        %v1667 = vmul.f32 %v1666, 1.442695
        %v1668 = vpow.pop %v1667
        %v1669 = vsel %vm938, %v1668, 0.0
        %1670 = vadd.xlane.f32.xlu0 %v1669
        %v1671 = vpop.xlane.xlu0 %1670
        %v1672 = vrcp.pop %v1671
        %v1673 = vmul.f32 %v1668, %v1672
        %v1675 = vsel %vm938, %v1673, 0
        %1677 = vmatprep.subr.mxu0 0.0
        %1678 = vmatpush1.msra.mxu0 %v860
        %1679 = vmatprep.subr.mxu0 0.0
        %1680 = vmatpush1.msra.mxu0 0.0
        %1681 = vmatprep.subr.mxu0 0.0
        %1682 = vmatpush1.msra.mxu0 0.0
        %1683 = vmatprep.subr.mxu0 0.0
        %1684 = vmatpush1.msra.mxu0 0.0
        %1685 = vmatprep.subr.mxu0 0.0
        %1686 = vmatpush1.msra.mxu0 0.0
        %1687 = vmatprep.subr.mxu0 0.0
        %1688 = vmatpush1.msra.mxu0 0.0
        %1689 = vmatprep.subr.mxu0 0.0
        %1690 = vmatpush1.msra.mxu0 0.0
        %1691 = vmatprep.subr.mxu0 0.0
        %1692 = vmatpush1.msra.mxu0 0.0
        %1693 = vmatprep.subr.mxu0 0.0
        %1694 = vmatpush1.msra.mxu0 0.0
        %1695 = vmatprep.subr.mxu0 0.0
        %1696 = vmatpush1.msra.mxu0 0.0
        %1697 = vmatprep.subr.mxu0 0.0
        %1698 = vmatpush1.msra.mxu0 0.0
        %1699 = vmatprep.subr.mxu0 0.0
        %1700 = vmatpush1.msra.mxu0 0.0
        %1701 = vmatprep.subr.mxu0 0.0
        %1702 = vmatpush1.msra.mxu0 0.0
        %1703 = vmatprep.subr.mxu0 0.0
        %1704 = vmatpush1.msra.mxu0 0.0
        %1705 = vmatprep.subr.mxu0 0.0
        %1706 = vmatpush1.msra.mxu0 0.0
        %1707 = vmatprep.subr.mxu0 0.0
        %1708 = vmatpush1.msra.mxu0 0.0
        %1709 = vmatprep.subr.mxu0 0.0
        %1710 = vmatpush1.msra.mxu0 0.0
        %1711 = vmatprep.subr.mxu0 0.0
        %1712 = vmatpush1.msra.mxu0 0.0
        %1713 = vmatprep.subr.mxu0 0.0
        %1714 = vmatpush1.msra.mxu0 0.0
        %1715 = vmatprep.subr.mxu0 0.0
        %1716 = vmatpush1.msra.mxu0 0.0
        %1717 = vmatprep.subr.mxu0 0.0
        %1718 = vmatpush1.msra.mxu0 0.0
        %1719 = vmatprep.subr.mxu0 0.0
        %1720 = vmatpush1.msra.mxu0 0.0
        %1721 = vmatprep.subr.mxu0 0.0
        %1722 = vmatpush1.msra.mxu0 0.0
        %1723 = vmatprep.subr.mxu0 0.0
        %1724 = vmatpush1.msra.mxu0 0.0
        %1725 = vmatprep.subr.mxu0 0.0
        %1726 = vmatpush1.msra.mxu0 0.0
        %1727 = vmatprep.subr.mxu0 0.0
        %1728 = vmatpush1.msra.mxu0 0.0
        %1729 = vmatprep.subr.mxu0 0.0
        %1730 = vmatpush1.msra.mxu0 0.0
        %1731 = vmatprep.subr.mxu0 0.0
        %1732 = vmatpush1.msra.mxu0 0.0
        %1733 = vmatprep.subr.mxu0 0.0
        %1734 = vmatpush1.msra.mxu0 0.0
        %1735 = vmatprep.subr.mxu0 0.0
        %1736 = vmatpush1.msra.mxu0 0.0
        %1737 = vmatprep.subr.mxu0 0.0
        %1738 = vmatpush1.msra.mxu0 0.0
        %1739 = vmatprep.subr.mxu0 0.0
        %1740 = vmatpush1.msra.mxu0 0.0
        %1741 = vmatprep.mubr.f32.mxu0 0.0
        %1742 = vmatmul.mubr.f32.gmra.mrb[0].mxu0 %v1675
        %v1743 = vpop.f32.mrb[0].mxu0
        %v1744 = vadd.f32 0.0, %v1743
        %v1745 = vpop.f32.mrb[0].mxu0
        %1746 = vdwg.mxu0
        %v1747 = vld [vmem:[#allocation7 + $0x180] sm:$0xff]
        %v1748 = vld [vmem:[#allocation7 + $0x188] sm:$0xff]
        %v1749 = vld [vmem:[#allocation7 + $0x190] sm:$0xff]
        %v1750 = vld [vmem:[#allocation7 + $0x198] sm:$0xff]
        %v1751 = vld [vmem:[#allocation7 + $0x1a0] sm:$0xff]
        %v1752 = vld [vmem:[#allocation7 + $0x1a8] sm:$0xff]
        %v1753 = vld [vmem:[#allocation7 + $0x1b0] sm:$0xff]
        %v1754 = vld [vmem:[#allocation7 + $0x1b8] sm:$0xff]
        %v1755 = vld [vmem:[#allocation7 + $0x1c0] sm:$0xff]
        %v1756 = vld [vmem:[#allocation7 + $0x1c8] sm:$0xff]
        %v1757 = vld [vmem:[#allocation7 + $0x1d0] sm:$0xff]
        %v1758 = vld [vmem:[#allocation7 + $0x1d8] sm:$0xff]
        %v1759 = vld [vmem:[#allocation7 + $0x1e0] sm:$0xff]
        %v1760 = vld [vmem:[#allocation7 + $0x1e8] sm:$0xff]
        %v1761 = vld [vmem:[#allocation7 + $0x1f0] sm:$0xff]
        %v1762 = vld [vmem:[#allocation7 + $0x1f8] sm:$0xff]
        %1763 = vmatprep.subr.mxu0 0.0
        %1764 = vmatpush1.msra.mxu0 %v1747
        %1765 = vmatprep.subr.mxu0 0.0
        %1766 = vmatpush1.msra.mxu0 %v1748
        %1767 = vmatprep.subr.mxu0 0.0
        %1768 = vmatpush1.msra.mxu0 %v1749
        %1769 = vmatprep.subr.mxu0 0.0
        %1770 = vmatpush1.msra.mxu0 %v1750
        %1771 = vmatprep.subr.mxu0 0.0
        %1772 = vmatpush1.msra.mxu0 %v1751
        %1773 = vmatprep.subr.mxu0 0.0
        %1774 = vmatpush1.msra.mxu0 %v1752
        %1775 = vmatprep.subr.mxu0 0.0
        %1776 = vmatpush1.msra.mxu0 %v1753
        %1777 = vmatprep.subr.mxu0 0.0
        %1778 = vmatpush1.msra.mxu0 %v1754
        %1779 = vmatprep.subr.mxu0 0.0
        %1780 = vmatpush1.msra.mxu0 %v1755
        %1781 = vmatprep.subr.mxu0 0.0
        %1782 = vmatpush1.msra.mxu0 %v1756
        %1783 = vmatprep.subr.mxu0 0.0
        %1784 = vmatpush1.msra.mxu0 %v1757
        %1785 = vmatprep.subr.mxu0 0.0
        %1786 = vmatpush1.msra.mxu0 %v1758
        %1787 = vmatprep.subr.mxu0 0.0
        %1788 = vmatpush1.msra.mxu0 %v1759
        %1789 = vmatprep.subr.mxu0 0.0
        %1790 = vmatpush1.msra.mxu0 %v1760
        %1791 = vmatprep.subr.mxu0 0.0
        %1792 = vmatpush1.msra.mxu0 %v1761
        %1793 = vmatprep.subr.mxu0 0.0
        %1794 = vmatpush1.msra.mxu0 %v1762
        %1795 = vmatprep.subr.mxu0 0.0
        %1796 = vmatpush1.msra.mxu0 0.0
        %1797 = vmatprep.subr.mxu0 0.0
        %1798 = vmatpush1.msra.mxu0 0.0
        %1799 = vmatprep.subr.mxu0 0.0
        %1800 = vmatpush1.msra.mxu0 0.0
        %1801 = vmatprep.subr.mxu0 0.0
        %1802 = vmatpush1.msra.mxu0 0.0
        %1803 = vmatprep.subr.mxu0 0.0
        %1804 = vmatpush1.msra.mxu0 0.0
        %1805 = vmatprep.subr.mxu0 0.0
        %1806 = vmatpush1.msra.mxu0 0.0
        %1807 = vmatprep.subr.mxu0 0.0
        %1808 = vmatpush1.msra.mxu0 0.0
        %1809 = vmatprep.subr.mxu0 0.0
        %1810 = vmatpush1.msra.mxu0 0.0
        %1811 = vmatprep.subr.mxu0 0.0
        %1812 = vmatpush1.msra.mxu0 0.0
        %1813 = vmatprep.subr.mxu0 0.0
        %1814 = vmatpush1.msra.mxu0 0.0
        %1815 = vmatprep.subr.mxu0 0.0
        %1816 = vmatpush1.msra.mxu0 0.0
        %1817 = vmatprep.subr.mxu0 0.0
        %1818 = vmatpush1.msra.mxu0 0.0
        %1819 = vmatprep.subr.mxu0 0.0
        %1820 = vmatpush1.msra.mxu0 0.0
        %1821 = vmatprep.subr.mxu0 0.0
        %1822 = vmatpush1.msra.mxu0 0.0
        %1823 = vmatprep.subr.mxu0 0.0
        %1824 = vmatpush1.msra.mxu0 0.0
        %1825 = vmatprep.subr.mxu0 0.0
        %1826 = vmatpush1.msra.mxu0 0.0
        %1827 = vmatprep.mubr.f32.mxu0 0.0
        %1828 = vmatmul.mubr.f32.gmra.mrb[0].mxu0 %v1744
        %v1829 = vpop.f32.mrb[0].mxu0
        %v1830 = vadd.f32 0.0, %v1829
        %v1831 = vpop.f32.mrb[0].mxu0
        %1832 = vdwg.mxu0
        %v1833 = vadd.f32 %v1591, %v1830
        %v1835 = vlaneseq
        %v1836 = vshrl.u32 %v1835, 7
        %v1837 = vsub.s32 0, %v1836
        %v1838 = vrot.slane %v435, %v1837
        %v1840 = vadd.f32 %v1833, %v1838
        %1841 = vst [vmem:[%s241] sm:$0xff] %v1840
        %s1842 = sand.u32 %s119, 1
        %s1843 = scalar_lea.sflag [#allocation4], %s1842
        %s1844 = sand.u32 %s119, 1
        %s1845 = smul.addr %s1844, 8
        %s1846 = scalar_lea.vmem [#allocation8], %s1845
        // Predicated region
        $region49: #{tpu_custom_call.1} parent=35 // pred_check
          %p1847 = pneg %p129
        $region50: #{tpu_custom_call.1} parent=35 // pred_check_branch
          %1849 = sbr.rel (%p1847) target = $region52
        $region51: #{tpu_custom_call.1} parent=35 // pred_region
          %s1851 = ssub.s32 128, 128
          %1852 = vsyncadd %s1843, %s1851
          %s1853 = smul.addr %s22, 128
          %s1854 = scalar_lea.hbm %s4, %s1853
          %s1856 = sshll.u32 %s1846, 4
          %s1857 = int_to_ptr.vmem [resolvable:$true] %s1856
          %1859 = dma.vmem_to_hbm [thread:$0]  %s1857, 128, %s1854, %s1843
        $region52: #{tpu_custom_call.1} parent=35 // pred_fallthru
          _
      $region36: #{tpu_custom_call.1} parent=5 // pred_fallthru
        _
      %p1860 = scmp.le.s32.totalorder 2, %s17
      // Predicated region
      $region53: #{tpu_custom_call.1} parent=5 // pred_check
        %p1861 = pneg %p1860
      $region54: #{tpu_custom_call.1} parent=5 // pred_check_branch
        %1863 = sbr.rel (%p1861) target = $region56
      $region55: #{tpu_custom_call.1} parent=5 // pred_region
        %s1864 = ssub.s32 %s17, 2
        // Predicated region
        $region57: #{tpu_custom_call.1} parent=55 // pred_check
          %p1865 = pneg %p135
        $region58: #{tpu_custom_call.1} parent=55 // pred_check_branch
          %1867 = sbr.rel (%p1865) target = $region60
        $region59: #{tpu_custom_call.1} parent=55 // pred_region
          %s1868 = sand.u32 %s120, 1
          %s1869 = scalar_lea.sflag [#allocation4], %s1868
          %s1870 = sand.u32 %s120, 1
          %s1871 = smul.addr %s1870, 8
          %s1872 = scalar_lea.vmem [#allocation8], %s1871
          %1873 = dma.done %s1869, 128
        $region60: #{tpu_custom_call.1} parent=55 // pred_fallthru
          _
      $region56: #{tpu_custom_call.1} parent=5 // pred_fallthru
        _
    $region6: #{tpu_custom_call.1} parent=1 // loop_footer
      %s21 = sadd.s32 1, %s17
    $region7: #{tpu_custom_call.1} parent=1 // loop_footer_branch
      %16 = sbr.rel target = $region3
    $region8: #{tpu_custom_call.1} parent=1 // loop_exit
      _
    %1874 = vsyncpa [#allocation3], 1
    %s1875 = scalar_lea.sflag [#allocation3], 1
    %1876 = vsyncpa %s1875, 1
    %1877 = vsyncpa [#allocation6], 1
    %1878 = vsyncpa [#allocation4], 1
    %s1879 = scalar_lea.sflag [#allocation4], 1
    %1880 = vsyncpa %s1879, 1

</llo_original>
